<compile_context>
chip_gen: v5e
topology: v5e:2x2
jax: 0.10.0
libtpu: 0.0.40
codegen_flags: <defaults>
</compile_context>

<pallas_src>
import jax
import jax.numpy as jnp
from jax.experimental import pallas as pl
from jax.experimental.pallas import tpu as pltpu

BN_EPS = 1e-5
DOM_PAD = 128  # lane-dense width for the 2-class domain head


def acada_kernel(feat_ref,             # [bt, HW, ct]  f32  backbone features (C tile)
                 w1_ref, b1_ref,       # [ct, H1] bf16, [1, H1] f32   fc1 (BN folded)
                 w2_ref, b2_ref,       # [H1, 128] bf16, [1, 128] f32 fc2 (lane-padded)
                 wp_ref, bp_ref,       # [ct, P] bf16, [1, P] f32     conv1x1 (as matmul)
                 gfeat_ref,            # out: [bt, ct]   global pooled features (this C tile)
                 dom_ref,              # out: [bt, 128]  domain logits (padded)
                 loc_ref,              # out: [bt, P]    local embedding
                 z_acc,                # scratch: [bt, H1]    f32  fc1 pre-activation accum
                 proj_acc):            # scratch: [bt*HW, P]  f32  conv1x1 pre-activation accum
    k = pl.program_id(1)
    nk = pl.num_programs(1)

    @pl.when(k == 0)
    def _init():
        z_acc[...] = jnp.zeros_like(z_acc)
        proj_acc[...] = jnp.zeros_like(proj_acc)

    feats = feat_ref[...]                                  # (bt, HW, ct) f32
    bt, hw, ct = feat_ref.shape

    # ---- global branch: adaptive avg pool (1,1) over HW for this channel tile ----
    gtile = jnp.mean(feats, axis=1)                        # (bt, ct) f32
    gfeat_ref[...] = gtile

    # ---- domain classifier: partial fc1 (BN folded into w1/b1 in the wrapper) ----
    z_acc[...] += jnp.dot(gtile.astype(jnp.bfloat16), w1_ref[...],
                          preferred_element_type=jnp.float32)          # (bt, H1)

    # ---- projection head: 1x1 conv as one flat 2-D matmul over this channel tile ----
    fflat = feats.reshape(bt * hw, ct).astype(jnp.bfloat16)            # (bt*HW, ct)
    proj_acc[...] += jnp.dot(fflat, wp_ref[...],
                             preferred_element_type=jnp.float32)       # (bt*HW, P)

    @pl.when(k == nk - 1)
    def _finalize():
        # fc1 bias + ReLU (Dropout eval = identity), then fc2 (lane-padded to 128)
        h = jnp.maximum(z_acc[...] + b1_ref[...], 0.0)                  # (bt, H1)
        dom_ref[...] = jnp.dot(h.astype(jnp.bfloat16), w2_ref[...],
                               preferred_element_type=jnp.float32) + b2_ref[...]
        # conv1x1 bias + ReLU, then adaptive avg pool over HW
        proj = jnp.maximum(proj_acc[...] + bp_ref[...], 0.0)            # (bt*HW, P)
        loc_ref[...] = jnp.mean(proj.reshape(bt, hw, -1), axis=1)       # (bt, P)


def acada_forward(features_nchw, params, *, c_tile=512, b_tile=None):
    """features_nchw: [B, C, Hf, Wf] float32 (backbone output).  Returns the 3 ACADA outputs."""
    B, C, Hf, Wf = features_nchw.shape
    HW = Hf * Wf
    feats = jnp.transpose(features_nchw, (0, 2, 3, 1)).reshape(B, HW, C)   # (B, HW, C)

    H1 = params['w1'].shape[1]
    P = params['wp'].shape[1]

    # ---- fold BatchNorm1d (eval, running stats) into fc1; cast weights to bf16 ----
    scale = params['gamma'] * jax.lax.rsqrt(params['rvar'] + BN_EPS)        # (1, H1)
    w1f = (params['w1'] * scale).astype(jnp.bfloat16)                       # (C, H1)
    b1f = (params['b1'] - params['rmean']) * scale + params['beta']         # (1, H1) f32

    # ---- pad fc2 to a lane-dense 128-wide output (sliced to [:, :2] afterwards) ----
    w2p = jnp.zeros((H1, DOM_PAD), jnp.float32).at[:, :2].set(params['w2']).astype(jnp.bfloat16)
    b2p = jnp.zeros((1, DOM_PAD), jnp.float32).at[:, :2].set(params['b2'])

    wp = params['wp'].astype(jnp.bfloat16)                                  # (C, P)
    bp = params['bp']                                                       # (1, P)

    bt = B if b_tile is None else min(b_tile, B)
    ct = min(c_tile, C)
    assert B % bt == 0 and C % ct == 0, "tile sizes must divide B and C"
    nb, nk = B // bt, C // ct

    grid_spec = pltpu.PrefetchScalarGridSpec(
        num_scalar_prefetch=0,
        grid=(nb, nk),                                      # (parallel B tiles, C reduction)
        in_specs=[
            pl.BlockSpec((bt, HW, ct), lambda b, k: (b, 0, k)),   # feats
            pl.BlockSpec((ct, H1),     lambda b, k: (k, 0)),      # fc1 weight (BN folded)
            pl.BlockSpec((1, H1),      lambda b, k: (0, 0)),      # fc1 bias   (BN folded)
            pl.BlockSpec((H1, DOM_PAD), lambda b, k: (0, 0)),     # fc2 weight (padded)
            pl.BlockSpec((1, DOM_PAD), lambda b, k: (0, 0)),      # fc2 bias   (padded)
            pl.BlockSpec((ct, P),      lambda b, k: (k, 0)),      # conv1x1 weight
            pl.BlockSpec((1, P),       lambda b, k: (0, 0)),      # conv1x1 bias
        ],
        out_specs=[
            pl.BlockSpec((bt, ct),       lambda b, k: (b, k)),    # global_feat_flat tile
            pl.BlockSpec((bt, DOM_PAD),  lambda b, k: (b, 0)),    # domain_pred (padded)
            pl.BlockSpec((bt, P),        lambda b, k: (b, 0)),    # local_emb
        ],
        scratch_shapes=[
            pltpu.VMEM((bt, H1), jnp.float32),        # fc1 pre-activation accumulator
            pltpu.VMEM((bt * HW, P), jnp.float32),    # conv1x1 pre-activation accumulator
        ],
    )

    gfeat, dom_pad, loc = pl.pallas_call(
        acada_kernel,
        out_shape=(
            jax.ShapeDtypeStruct((B, C), jnp.float32),        # global_feat_flat
            jax.ShapeDtypeStruct((B, DOM_PAD), jnp.float32),  # domain_pred (padded)
            jax.ShapeDtypeStruct((B, P), jnp.float32),        # local_emb
        ),
        grid_spec=grid_spec,
        compiler_params=pltpu.CompilerParams(
            dimension_semantics=("parallel", "arbitrary"),
            vmem_limit_bytes=32 * 1024 * 1024),
    )(feats, w1f, b1f, w2p, b2p, wp, bp)

    return gfeat, dom_pad[:, :2], loc


def acada_reference(features_nchw, params):
    """Pure-JAX f32 reference (mirrors PyTorch eval-mode semantics)."""
    B, C, Hf, Wf = features_nchw.shape
    gfeat = jnp.mean(features_nchw, axis=(2, 3))                           # [B, C]
    z = gfeat @ params['w1'] + params['b1']
    z = (z - params['rmean']) / jnp.sqrt(params['rvar'] + BN_EPS) * params['gamma'] + params['beta']
    dom = jnp.maximum(z, 0.0) @ params['w2'] + params['b2']
    feats = jnp.transpose(features_nchw, (0, 2, 3, 1)).reshape(B, Hf * Wf, C)
    proj = jnp.maximum(jnp.einsum('bsc,cp->bsp', feats, params['wp']) + params['bp'], 0.0)
    loc = jnp.mean(proj, axis=1)
    return gfeat, dom, loc


def init_params(key, C=2048, H1=512, P=256):
    """Deterministic synthetic weights (shapes match DomainClassifier / ProjectionHead)."""
    ks = jax.random.split(key, 8)
    s1 = 1.0 / jnp.sqrt(C)
    s2 = 1.0 / jnp.sqrt(H1)
    return dict(
        # fc1: torch Linear(2048, 512) weight [512, 2048] -> stored transposed [2048, 512]
        w1=jax.random.uniform(ks[0], (C, H1), jnp.float32, -s1, s1),
        b1=jax.random.uniform(ks[1], (1, H1), jnp.float32, -s1, s1),
        # bn1 (eval): affine + running stats
        gamma=jnp.ones((1, H1), jnp.float32),
        beta=jnp.zeros((1, H1), jnp.float32),
        rmean=0.1 * jax.random.normal(ks[2], (1, H1), jnp.float32),
        rvar=jnp.ones((1, H1), jnp.float32) + 0.1 * jax.random.uniform(ks[3], (1, H1)),
        # fc2: Linear(512, 2) -> [512, 2]
        w2=jax.random.uniform(ks[4], (H1, 2), jnp.float32, -s2, s2),
        b2=jax.random.uniform(ks[5], (1, 2), jnp.float32, -s2, s2),
        # conv1x1: Conv2d(2048, 256, 1) weight [256, 2048, 1, 1] -> [2048, 256]
        wp=jax.random.uniform(ks[6], (C, P), jnp.float32, -s1, s1),
        bp=jax.random.uniform(ks[7], (1, P), jnp.float32, -s1, s1),
    )


if __name__ == "__main__":
    key = jax.random.PRNGKey(0)
    kf, kp = jax.random.split(key)

    # Small, module-consistent shapes: batch=2, C=2048 backbone channels, 4x4 feature map
    # (what ResNet50 produces for a 128x128 image).
    B, C, Hf, Wf = 2, 2048, 4, 4
    features = jax.random.normal(kf, (B, C, Hf, Wf), jnp.float32)
    params = init_params(kp, C=C, H1=512, P=256)

    gfeat, dom, loc = jax.block_until_ready(acada_forward(features, params))
    gfeat_r, dom_r, loc_r = acada_reference(features, params)

    assert gfeat.shape == (B, 2048) and dom.shape == (B, 2) and loc.shape == (B, 256)
    # global features are computed purely in f32 -> tight tolerance
    assert jnp.allclose(gfeat, gfeat_r, atol=1e-5, rtol=1e-5)
    # domain / local heads use bf16 weights (f32 accumulation) -> bf16-level tolerance
    assert jnp.allclose(dom, dom_r, atol=2e-2, rtol=2e-2)
    assert jnp.allclose(loc, loc_r, atol=2e-2, rtol=2e-2)

    print("KERNEL_OK")
</pallas_src>

<mosaic_0001>
module attributes {stable_mosaic.version = 11 : i64} {
  func.func @acada_kernel(%arg0: i32, %arg1: i32, %arg2: memref<2x16x512xf32, #tpu.memory_space<vmem>>, %arg3: memref<512x512xbf16, #tpu.memory_space<vmem>>, %arg4: memref<1x512xf32, #tpu.memory_space<vmem>>, %arg5: memref<512x128xbf16, #tpu.memory_space<vmem>>, %arg6: memref<1x128xf32, #tpu.memory_space<vmem>>, %arg7: memref<512x256xbf16, #tpu.memory_space<vmem>>, %arg8: memref<1x256xf32, #tpu.memory_space<vmem>>, %arg9: memref<2x512xf32, #tpu.memory_space<vmem>>, %arg10: memref<2x128xf32, #tpu.memory_space<vmem>>, %arg11: memref<2x256xf32, #tpu.memory_space<vmem>>, %arg12: memref<2x512xf32, #tpu.memory_space<vmem>>, %arg13: memref<32x256xf32, #tpu.memory_space<vmem>>) attributes {dimension_semantics = [#tpu.dimension_semantics<parallel>, #tpu.dimension_semantics<arbitrary>], iteration_bounds = array<i64: 1, 4>, scalar_prefetch = 0 : i64, scratch_operands = 2 : i64, tpu.core_type = #tpu.core_type<tc>, window_params = [{transform_indices = @transform_0, window_bounds = array<i64: 2, 16, 512>}, {transform_indices = @transform_1, window_bounds = array<i64: 512, 512>}, {pipeline_mode = #tpu.pipeline_mode<synchronous>, transform_indices = @transform_2, window_bounds = array<i64: 1, 512>}, {pipeline_mode = #tpu.pipeline_mode<synchronous>, transform_indices = @transform_3, window_bounds = array<i64: 512, 128>}, {pipeline_mode = #tpu.pipeline_mode<synchronous>, transform_indices = @transform_4, window_bounds = array<i64: 1, 128>}, {transform_indices = @transform_5, window_bounds = array<i64: 512, 256>}, {pipeline_mode = #tpu.pipeline_mode<synchronous>, transform_indices = @transform_6, window_bounds = array<i64: 1, 256>}, {transform_indices = @transform_7, window_bounds = array<i64: 2, 512>}, {transform_indices = @transform_8, window_bounds = array<i64: 2, 128>}, {transform_indices = @transform_9, window_bounds = array<i64: 2, 256>}]} {
    %c0_i32 = arith.constant 0 : i32
    %0 = arith.cmpi eq, %arg1, %c0_i32 : i32
    %1 = arith.extui %0 : i1 to i32
    %c0_i32_0 = arith.constant 0 : i32
    %2 = arith.cmpi ne, %1, %c0_i32_0 : i32
    scf.if %2 {
      %cst_21 = arith.constant 0.000000e+00 : f32
      %24 = vector.broadcast %cst_21 : f32 to vector<2x512xf32>
      %c0_22 = arith.constant 0 : index
      %c0_23 = arith.constant 0 : index
      %25 = vector.load %arg12[%c0_22, %c0_23] : memref<2x512xf32, #tpu.memory_space<vmem>>, vector<2x512xf32>
      tpu.vector_store %arg12[%c0_22, %c0_23], %24 {strides = array<i32>} : memref<2x512xf32, #tpu.memory_space<vmem>>, vector<2x512xf32>,
      %cst_24 = arith.constant 0.000000e+00 : f32
      %26 = vector.broadcast %cst_24 : f32 to vector<32x256xf32>
      %c0_25 = arith.constant 0 : index
      %c0_26 = arith.constant 0 : index
      %27 = vector.load %arg13[%c0_25, %c0_26] : memref<32x256xf32, #tpu.memory_space<vmem>>, vector<32x256xf32>
      tpu.vector_store %arg13[%c0_25, %c0_26], %26 {strides = array<i32>} : memref<32x256xf32, #tpu.memory_space<vmem>>, vector<32x256xf32>,
    } else {
    }
    %c0 = arith.constant 0 : index
    %c0_1 = arith.constant 0 : index
    %c0_2 = arith.constant 0 : index
    %3 = vector.load %arg2[%c0, %c0_1, %c0_2] : memref<2x16x512xf32, #tpu.memory_space<vmem>>, vector<2x16x512xf32>
    %cst = arith.constant dense<0.000000e+00> : vector<2x512xf32>
    %4 = vector.multi_reduction <add>, %3, %cst [1] : vector<2x16x512xf32> to vector<2x512xf32>
    %cst_3 = arith.constant 1.600000e+01 : f32
    %5 = vector.broadcast %cst_3 : f32 to vector<2x512xf32>
    %6 = arith.divf %4, %5 : vector<2x512xf32>
    %c0_4 = arith.constant 0 : index
    %c0_5 = arith.constant 0 : index
    %7 = vector.load %arg9[%c0_4, %c0_5] : memref<2x512xf32, #tpu.memory_space<vmem>>, vector<2x512xf32>
    tpu.vector_store %arg9[%c0_4, %c0_5], %6 {strides = array<i32>} : memref<2x512xf32, #tpu.memory_space<vmem>>, vector<2x512xf32>,
    %c0_6 = arith.constant 0 : index
    %c0_7 = arith.constant 0 : index
    %8 = vector.load %arg12[%c0_6, %c0_7] : memref<2x512xf32, #tpu.memory_space<vmem>>, vector<2x512xf32>
    %9 = arith.truncf %6 : vector<2x512xf32> to vector<2x512xbf16>
    %c0_8 = arith.constant 0 : index
    %c0_9 = arith.constant 0 : index
    %10 = vector.load %arg3[%c0_8, %c0_9] : memref<512x512xbf16, #tpu.memory_space<vmem>>, vector<512x512xbf16>
    %cst_10 = arith.constant dense<0.000000e+00> : vector<2x512xf32>
    %11 = tpu.matmul %9, %10, %cst_10 {dimension_numbers = #tpu.dot_dimension_numbers<[1], [0], [0], [1], [0, 0, 1, 1], [], []>} : vector<2x512xbf16>, vector<512x512xbf16>, vector<2x512xf32> -> vector<2x512xf32>
    %12 = arith.addf %8, %11 : vector<2x512xf32>
    %c0_11 = arith.constant 0 : index
    %c0_12 = arith.constant 0 : index
    %13 = vector.load %arg12[%c0_11, %c0_12] : memref<2x512xf32, #tpu.memory_space<vmem>>, vector<2x512xf32>
    tpu.vector_store %arg12[%c0_11, %c0_12], %12 {strides = array<i32>} : memref<2x512xf32, #tpu.memory_space<vmem>>, vector<2x512xf32>,
    %14 = vector.shape_cast %3 : vector<2x16x512xf32> to vector<32x512xf32>
    %15 = arith.truncf %14 : vector<32x512xf32> to vector<32x512xbf16>
    %c0_13 = arith.constant 0 : index
    %c0_14 = arith.constant 0 : index
    %16 = vector.load %arg13[%c0_13, %c0_14] : memref<32x256xf32, #tpu.memory_space<vmem>>, vector<32x256xf32>
    %c0_15 = arith.constant 0 : index
    %c0_16 = arith.constant 0 : index
    %17 = vector.load %arg7[%c0_15, %c0_16] : memref<512x256xbf16, #tpu.memory_space<vmem>>, vector<512x256xbf16>
    %cst_17 = arith.constant dense<0.000000e+00> : vector<32x256xf32>
    %18 = tpu.matmul %15, %17, %cst_17 {dimension_numbers = #tpu.dot_dimension_numbers<[1], [0], [0], [1], [0, 0, 1, 1], [], []>} : vector<32x512xbf16>, vector<512x256xbf16>, vector<32x256xf32> -> vector<32x256xf32>
    %19 = arith.addf %16, %18 : vector<32x256xf32>
    %c0_18 = arith.constant 0 : index
    %c0_19 = arith.constant 0 : index
    %20 = vector.load %arg13[%c0_18, %c0_19] : memref<32x256xf32, #tpu.memory_space<vmem>>, vector<32x256xf32>
    tpu.vector_store %arg13[%c0_18, %c0_19], %19 {strides = array<i32>} : memref<32x256xf32, #tpu.memory_space<vmem>>, vector<32x256xf32>,
    %c3_i32 = arith.constant 3 : i32
    %21 = arith.cmpi eq, %arg1, %c3_i32 : i32
    %22 = arith.extui %21 : i1 to i32
    %c0_i32_20 = arith.constant 0 : i32
    %23 = arith.cmpi ne, %22, %c0_i32_20 : i32
    scf.if %23 {
      %c0_21 = arith.constant 0 : index
      %c0_22 = arith.constant 0 : index
      %24 = vector.load %arg12[%c0_21, %c0_22] : memref<2x512xf32, #tpu.memory_space<vmem>>, vector<2x512xf32>
      %c0_23 = arith.constant 0 : index
      %c0_24 = arith.constant 0 : index
      %25 = vector.load %arg4[%c0_23, %c0_24] : memref<1x512xf32, #tpu.memory_space<vmem>>, vector<1x512xf32>
      %26 = vector.broadcast %25 : vector<1x512xf32> to vector<2x512xf32>
      %27 = arith.addf %24, %26 : vector<2x512xf32>
      %cst_25 = arith.constant 0.000000e+00 : f32
      %28 = vector.broadcast %cst_25 : f32 to vector<2x512xf32>
      %29 = arith.maximumf %27, %28 : vector<2x512xf32>
      %30 = arith.truncf %29 : vector<2x512xf32> to vector<2x512xbf16>
      %c0_26 = arith.constant 0 : index
      %c0_27 = arith.constant 0 : index
      %31 = vector.load %arg5[%c0_26, %c0_27] : memref<512x128xbf16, #tpu.memory_space<vmem>>, vector<512x128xbf16>
      %cst_28 = arith.constant dense<0.000000e+00> : vector<2x128xf32>
      %32 = tpu.matmul %30, %31, %cst_28 {dimension_numbers = #tpu.dot_dimension_numbers<[1], [0], [0], [1], [0, 0, 1, 1], [], []>} : vector<2x512xbf16>, vector<512x128xbf16>, vector<2x128xf32> -> vector<2x128xf32>
      %c0_29 = arith.constant 0 : index
      %c0_30 = arith.constant 0 : index
      %33 = vector.load %arg6[%c0_29, %c0_30] : memref<1x128xf32, #tpu.memory_space<vmem>>, vector<1x128xf32>
      %34 = vector.broadcast %33 : vector<1x128xf32> to vector<2x128xf32>
      %35 = arith.addf %32, %34 : vector<2x128xf32>
      %c0_31 = arith.constant 0 : index
      %c0_32 = arith.constant 0 : index
      %36 = vector.load %arg10[%c0_31, %c0_32] : memref<2x128xf32, #tpu.memory_space<vmem>>, vector<2x128xf32>
      tpu.vector_store %arg10[%c0_31, %c0_32], %35 {strides = array<i32>} : memref<2x128xf32, #tpu.memory_space<vmem>>, vector<2x128xf32>,
      %c0_33 = arith.constant 0 : index
      %c0_34 = arith.constant 0 : index
      %37 = vector.load %arg13[%c0_33, %c0_34] : memref<32x256xf32, #tpu.memory_space<vmem>>, vector<32x256xf32>
      %c0_35 = arith.constant 0 : index
      %c0_36 = arith.constant 0 : index
      %38 = vector.load %arg8[%c0_35, %c0_36] : memref<1x256xf32, #tpu.memory_space<vmem>>, vector<1x256xf32>
      %39 = vector.broadcast %38 : vector<1x256xf32> to vector<32x256xf32>
      %40 = arith.addf %37, %39 : vector<32x256xf32>
      %cst_37 = arith.constant 0.000000e+00 : f32
      %41 = vector.broadcast %cst_37 : f32 to vector<32x256xf32>
      %42 = arith.maximumf %40, %41 : vector<32x256xf32>
      %43 = vector.shape_cast %42 : vector<32x256xf32> to vector<2x16x256xf32>
      %cst_38 = arith.constant dense<0.000000e+00> : vector<2x256xf32>
      %44 = vector.multi_reduction <add>, %43, %cst_38 [1] : vector<2x16x256xf32> to vector<2x256xf32>
      %cst_39 = arith.constant 1.600000e+01 : f32
      %45 = vector.broadcast %cst_39 : f32 to vector<2x256xf32>
      %46 = arith.divf %44, %45 : vector<2x256xf32>
      %c0_40 = arith.constant 0 : index
      %c0_41 = arith.constant 0 : index
      %47 = vector.load %arg11[%c0_40, %c0_41] : memref<2x256xf32, #tpu.memory_space<vmem>>, vector<2x256xf32>
      tpu.vector_store %arg11[%c0_40, %c0_41], %46 {strides = array<i32>} : memref<2x256xf32, #tpu.memory_space<vmem>>, vector<2x256xf32>,
    } else {
    }
    return
  }
  func.func @transform_0(%arg0: i32, %arg1: i32) -> (i32, i32, i32) {
    %c0_i32 = arith.constant 0 : i32
    %c0_i32_0 = arith.constant 0 : i32
    return %arg0, %c0_i32, %arg1 : i32, i32, i32
  }
  func.func @transform_1(%arg0: i32, %arg1: i32) -> (i32, i32) {
    %c0_i32 = arith.constant 0 : i32
    %c0_i32_0 = arith.constant 0 : i32
    return %arg1, %c0_i32 : i32, i32
  }
  func.func @transform_2(%arg0: i32, %arg1: i32) -> (i32, i32) {
    %c0_i32 = arith.constant 0 : i32
    %c0_i32_0 = arith.constant 0 : i32
    %c0_i32_1 = arith.constant 0 : i32
    return %c0_i32, %c0_i32_0 : i32, i32
  }
  func.func @transform_3(%arg0: i32, %arg1: i32) -> (i32, i32) {
    %c0_i32 = arith.constant 0 : i32
    %c0_i32_0 = arith.constant 0 : i32
    %c0_i32_1 = arith.constant 0 : i32
    return %c0_i32, %c0_i32_0 : i32, i32
  }
  func.func @transform_4(%arg0: i32, %arg1: i32) -> (i32, i32) {
    %c0_i32 = arith.constant 0 : i32
    %c0_i32_0 = arith.constant 0 : i32
    %c0_i32_1 = arith.constant 0 : i32
    return %c0_i32, %c0_i32_0 : i32, i32
  }
  func.func @transform_5(%arg0: i32, %arg1: i32) -> (i32, i32) {
    %c0_i32 = arith.constant 0 : i32
    %c0_i32_0 = arith.constant 0 : i32
    return %arg1, %c0_i32 : i32, i32
  }
  func.func @transform_6(%arg0: i32, %arg1: i32) -> (i32, i32) {
    %c0_i32 = arith.constant 0 : i32
    %c0_i32_0 = arith.constant 0 : i32
    %c0_i32_1 = arith.constant 0 : i32
    return %c0_i32, %c0_i32_0 : i32, i32
  }
  func.func @transform_7(%arg0: i32, %arg1: i32) -> (i32, i32) {
    %c0_i32 = arith.constant 0 : i32
    return %arg0, %arg1 : i32, i32
  }
  func.func @transform_8(%arg0: i32, %arg1: i32) -> (i32, i32) {
    %c0_i32 = arith.constant 0 : i32
    %c0_i32_0 = arith.constant 0 : i32
    return %arg0, %c0_i32 : i32, i32
  }
  func.func @transform_9(%arg0: i32, %arg1: i32) -> (i32, i32) {
    %c0_i32 = arith.constant 0 : i32
    %c0_i32_0 = arith.constant 0 : i32
    return %arg0, %c0_i32 : i32, i32
  }
}

</mosaic_0001>

<llo_original>
// kernel: tpu_custom_call.1
$region0: #{tpu_custom_call.1}
  #allocation0 [shape = 'u32[]', space=smem, size = 0x4, offset = 0x4, fixed_abs, tag = 'smem constant byte address 0x4 - core index']
  #allocation1 [shape = 'u32[72,128]{1,0:T(1,128)}', space=vmem, size = 0x9000, scoped, tag = 'internal scratch']
  #allocation2 [shape = 'f32[2,512]{1,0:T(2,128)}', space=vmem, size = 0x1000, scoped, tag = 'scratch operand']
  #allocation3 [shape = 'f32[32,256]{1,0:T(8,128)}', space=vmem, size = 0x8000, scoped, tag = 'scratch operand']
  %s0 = inlined_call_operand.hbm [shape: f32[2,16,2048], index: 0, kind: input, shape index: {}]
  %s1 = inlined_call_operand.hbm [shape: bf16[2048,512], index: 1, kind: input, shape index: {}]
  %s2 = inlined_call_operand.hbm [shape: f32[1,512], index: 2, kind: input, shape index: {}]
  %s3 = inlined_call_operand.hbm [shape: bf16[512,128], index: 3, kind: input, shape index: {}]
  %s4 = inlined_call_operand.hbm [shape: f32[1,128], index: 4, kind: input, shape index: {}]
  %s5 = inlined_call_operand.hbm [shape: bf16[2048,256], index: 5, kind: input, shape index: {}]
  %s6 = inlined_call_operand.hbm [shape: f32[1,256], index: 6, kind: input, shape index: {}]
  %s7 = inlined_call_operand.hbm [shape: f32[2,2048], index: 7, kind: output, shape index: {0}]
  %s8 = inlined_call_operand.hbm [shape: f32[2,128], index: 8, kind: output, shape index: {1}]
  %s9 = inlined_call_operand.hbm [shape: f32[2,256], index: 9, kind: output, shape index: {2}]
  %10 = xla_tuple %s7, %s8, %s9
  %s11 = sld [smem:[#allocation0]]
  $region113: #{tpu_custom_call.1} parent=0
    _
  %s13 = ssub.s32 1, %s11
  %s14 = scalar_select 0, %s13, %s11
  $region1: #{tpu_custom_call.1} parent=0
    #allocation4 [shape = 'u8[131072]{0}', space=vmem, size = 0x20000, scoped, tag = 'input window, operand 0']
    #allocation5 [shape = 's32[2]{0}', space=sflag, size = 0x8, scoped, tag = 'scoped memory for tpu_custom_call.1']
    #allocation6 [shape = 's32[2]{0}', space=sflag, size = 0x8, scoped, tag = 'scoped memory for tpu_custom_call.1']
    #allocation7 [shape = 'u8[1048576]{0}', space=vmem, size = 0x100000, scoped, tag = 'input window, operand 1']
    #allocation8 [shape = 's32[2]{0}', space=sflag, size = 0x8, scoped, tag = 'scoped memory for tpu_custom_call.1']
    #allocation9 [shape = 'u8[2048]{0}', space=vmem, size = 0x800, scoped, tag = 'input window, operand 2, single buffered']
    #allocation10 [shape = 'u8[131072]{0}', space=vmem, size = 0x20000, scoped, tag = 'input window, operand 3, single buffered']
    #allocation11 [shape = 's32[1]{0}', space=sflag, size = 0x4, scoped, tag = 'scoped memory for tpu_custom_call.1']
    #allocation12 [shape = 'u8[512]{0}', space=vmem, size = 0x400, scoped, tag = 'input window, operand 4, single buffered']
    #allocation13 [shape = 'u8[524288]{0}', space=vmem, size = 0x80000, scoped, tag = 'input window, operand 5']
    #allocation14 [shape = 's32[2]{0}', space=sflag, size = 0x8, scoped, tag = 'scoped memory for tpu_custom_call.1']
    #allocation15 [shape = 'u8[1024]{0}', space=vmem, size = 0x400, scoped, tag = 'input window, operand 6, single buffered']
    #allocation16 [shape = 'u8[8192]{0}', space=vmem, size = 0x2000, scoped, tag = 'output window, operand 0']
    #allocation17 [shape = 'u8[1024]{0}', space=vmem, size = 0x400, scoped, tag = 'output window, operand 1, single buffered']
    #allocation18 [shape = 's32[1]{0}', space=sflag, size = 0x4, scoped, tag = 'scoped memory for tpu_custom_call.1']
    #allocation19 [shape = 'u8[2048]{0}', space=vmem, size = 0x800, scoped, tag = 'output window, operand 2, single buffered']
    %15 = vsyncpa [#allocation5], 0
    %s16 = scalar_lea.sflag [#allocation5], 1
    %17 = vsyncpa %s16, 0
    %18 = vsyncpa [#allocation8], 0
    %s19 = scalar_lea.sflag [#allocation8], 1
    %20 = vsyncpa %s19, 0
    %21 = vsyncpa [#allocation11], 0
    %22 = vsyncpa [#allocation14], 0
    %s23 = scalar_lea.sflag [#allocation14], 1
    %24 = vsyncpa %s23, 0
    %25 = vsyncpa [#allocation6], 0
    %s26 = scalar_lea.sflag [#allocation6], 1
    %27 = vsyncpa %s26, 0
    %28 = vsyncpa [#allocation18], 0
    loop: start=0, step=1, limit=6
    $region2: #{tpu_custom_call.1} parent=1 // loop_pre_header
      _
    $region3: #{tpu_custom_call.1} parent=1 // loop_header
      %s30 = sphi 0, %s34
      %p31 = scmp.ge.s32.totalorder %s30, 6
      %s37 = sphi 0, %s49
      %s38 = sphi 0, %s45
      %s39 = sphi 0, %s37
      %s40 = sphi 0, %s38
      %s41 = sphi 0, %s39
      %s42 = sphi 0, %s40
      %s54 = sphi 0, %s56
      %s57 = sphi 0, %s54
      %s58 = sphi 0, %s57
      %s74 = sphi 0, %s58
      %s80 = sphi 0, %s82
      %s83 = sphi 0, %s80
      %s84 = sphi 0, %s83
      %s100 = sphi 0, %s84
      %s104 = sphi 0, %s104
      %s106 = sphi 0, %s104
      %s107 = sphi 0, %s106
      %s121 = sphi 0, %s107
      %s125 = sphi 0, %s125
      %s127 = sphi 0, %s125
      %s128 = sphi 0, %s127
      %s142 = sphi 0, %s128
      %s146 = sphi 0, %s146
      %s148 = sphi 0, %s146
      %s149 = sphi 0, %s148
      %s163 = sphi 0, %s149
      %s169 = sphi 0, %s171
      %s172 = sphi 0, %s169
      %s173 = sphi 0, %s172
      %s189 = sphi 0, %s173
      %s193 = sphi 0, %s193
      %s195 = sphi 0, %s193
      %s196 = sphi 0, %s195
      %s210 = sphi 0, %s196
      %s218 = sphi 0, %s220
      %s221 = sphi 0, %s218
      %s222 = sphi 0, %s221
      %s238 = sphi 0, %s222
      %s244 = sphi 0, %s246
      %s247 = sphi 0, %s244
      %s248 = sphi 0, %s247
      %s264 = sphi 0, %s248
      %s270 = sphi 0, %s272
      %s273 = sphi 0, %s270
      %s274 = sphi 0, %s273
      %s290 = sphi 0, %s274
    $region4: #{tpu_custom_call.1} parent=1 // loop_header_branch
      %33 = sbr.rel (%p31) target = $region8
    $region5: #{tpu_custom_call.1} parent=1 // loop_body
      %s35 = ssub.s32 %s30, 1
      %s36 = ssub.s32 %s30, 2
      %s43 = sadd.s32 1, %s38
      %p44 = scmp.ge.s32.totalorder %s43, 4
      %s45 = scalar_select %p44, 0, %s43
      %s46 = sadd.s32 1, %s37
      %s47 = scalar_select %p44, %s46, %s37
      %p48 = scmp.ge.s32.totalorder %s47, 1
      %s49 = scalar_select %p48, 0, %s47
      %s50 = ssub.s32 %s37, %s49
      %s51 = ssub.s32 %s38, %s45
      %s52 = sor.u32 %s50, %s51
      %p53 = scmp.eq.s32.totalorder %s52, 0
      %s55 = sadd.s32 %s54, 1
      %s56 = scalar_select %p53, %s54, %s55
      %p59 = pneg %p53
      %p60 = scmp.eq.s32.totalorder %s30, 3
      %p61 = por %p59, %p60
      %p62 = scmp.ne.s32.totalorder %s54, %s57
      %p63 = scmp.eq.s32.totalorder %s30, 0
      %p64 = por %p62, %p63
      %p65 = scmp.ne.s32.totalorder %s54, %s57
      %p66 = scmp.eq.s32.totalorder %s35, 3
      %p67 = por %p65, %p66
      %p68 = scmp.ne.s32.totalorder %s57, %s58
      %p69 = scmp.eq.s32.totalorder %s35, 0
      %p70 = por %p68, %p69
      %p71 = scmp.ne.s32.totalorder %s57, %s58
      %p72 = scmp.eq.s32.totalorder %s36, 3
      %p73 = por %p71, %p72
      %p75 = scmp.ne.s32.totalorder %s58, %s74
      %p76 = scmp.eq.s32.totalorder %s36, 0
      %p77 = por %p75, %p76
      %s78 = ssub.s32 %s38, %s45
      %p79 = scmp.eq.s32.totalorder %s78, 0
      %s81 = sadd.s32 %s80, 1
      %s82 = scalar_select %p79, %s80, %s81
      %p85 = pneg %p79
      %p86 = scmp.eq.s32.totalorder %s30, 3
      %p87 = por %p85, %p86
      %p88 = scmp.ne.s32.totalorder %s80, %s83
      %p89 = scmp.eq.s32.totalorder %s30, 0
      %p90 = por %p88, %p89
      %p91 = scmp.ne.s32.totalorder %s80, %s83
      %p92 = scmp.eq.s32.totalorder %s35, 3
      %p93 = por %p91, %p92
      %p94 = scmp.ne.s32.totalorder %s83, %s84
      %p95 = scmp.eq.s32.totalorder %s35, 0
      %p96 = por %p94, %p95
      %p97 = scmp.ne.s32.totalorder %s83, %s84
      %p98 = scmp.eq.s32.totalorder %s36, 3
      %p99 = por %p97, %p98
      %p101 = scmp.ne.s32.totalorder %s84, %s100
      %p102 = scmp.eq.s32.totalorder %s36, 0
      %p103 = por %p101, %p102
      %s105 = sadd.s32 %s104, 1
      %p108 = scmp.eq.s32.totalorder %s30, 3
      %p109 = scmp.ne.s32.totalorder %s104, %s106
      %p110 = scmp.eq.s32.totalorder %s30, 0
      %p111 = por %p109, %p110
      %p112 = scmp.ne.s32.totalorder %s104, %s106
      %p113 = scmp.eq.s32.totalorder %s35, 3
      %p114 = por %p112, %p113
      %p115 = scmp.ne.s32.totalorder %s106, %s107
      %p116 = scmp.eq.s32.totalorder %s35, 0
      %p117 = por %p115, %p116
      %p118 = scmp.ne.s32.totalorder %s106, %s107
      %p119 = scmp.eq.s32.totalorder %s36, 3
      %p120 = por %p118, %p119
      %p122 = scmp.ne.s32.totalorder %s107, %s121
      %p123 = scmp.eq.s32.totalorder %s36, 0
      %p124 = por %p122, %p123
      %s126 = sadd.s32 %s125, 1
      %p129 = scmp.eq.s32.totalorder %s30, 3
      %p130 = scmp.ne.s32.totalorder %s125, %s127
      %p131 = scmp.eq.s32.totalorder %s30, 0
      %p132 = por %p130, %p131
      %p133 = scmp.ne.s32.totalorder %s125, %s127
      %p134 = scmp.eq.s32.totalorder %s35, 3
      %p135 = por %p133, %p134
      %p136 = scmp.ne.s32.totalorder %s127, %s128
      %p137 = scmp.eq.s32.totalorder %s35, 0
      %p138 = por %p136, %p137
      %p139 = scmp.ne.s32.totalorder %s127, %s128
      %p140 = scmp.eq.s32.totalorder %s36, 3
      %p141 = por %p139, %p140
      %p143 = scmp.ne.s32.totalorder %s128, %s142
      %p144 = scmp.eq.s32.totalorder %s36, 0
      %p145 = por %p143, %p144
      %s147 = sadd.s32 %s146, 1
      %p150 = scmp.eq.s32.totalorder %s30, 3
      %p151 = scmp.ne.s32.totalorder %s146, %s148
      %p152 = scmp.eq.s32.totalorder %s30, 0
      %p153 = por %p151, %p152
      %p154 = scmp.ne.s32.totalorder %s146, %s148
      %p155 = scmp.eq.s32.totalorder %s35, 3
      %p156 = por %p154, %p155
      %p157 = scmp.ne.s32.totalorder %s148, %s149
      %p158 = scmp.eq.s32.totalorder %s35, 0
      %p159 = por %p157, %p158
      %p160 = scmp.ne.s32.totalorder %s148, %s149
      %p161 = scmp.eq.s32.totalorder %s36, 3
      %p162 = por %p160, %p161
      %p164 = scmp.ne.s32.totalorder %s149, %s163
      %p165 = scmp.eq.s32.totalorder %s36, 0
      %p166 = por %p164, %p165
      %s167 = ssub.s32 %s38, %s45
      %p168 = scmp.eq.s32.totalorder %s167, 0
      %s170 = sadd.s32 %s169, 1
      %s171 = scalar_select %p168, %s169, %s170
      %p174 = pneg %p168
      %p175 = scmp.eq.s32.totalorder %s30, 3
      %p176 = por %p174, %p175
      %p177 = scmp.ne.s32.totalorder %s169, %s172
      %p178 = scmp.eq.s32.totalorder %s30, 0
      %p179 = por %p177, %p178
      %p180 = scmp.ne.s32.totalorder %s169, %s172
      %p181 = scmp.eq.s32.totalorder %s35, 3
      %p182 = por %p180, %p181
      %p183 = scmp.ne.s32.totalorder %s172, %s173
      %p184 = scmp.eq.s32.totalorder %s35, 0
      %p185 = por %p183, %p184
      %p186 = scmp.ne.s32.totalorder %s172, %s173
      %p187 = scmp.eq.s32.totalorder %s36, 3
      %p188 = por %p186, %p187
      %p190 = scmp.ne.s32.totalorder %s173, %s189
      %p191 = scmp.eq.s32.totalorder %s36, 0
      %p192 = por %p190, %p191
      %s194 = sadd.s32 %s193, 1
      %p197 = scmp.eq.s32.totalorder %s30, 3
      %p198 = scmp.ne.s32.totalorder %s193, %s195
      %p199 = scmp.eq.s32.totalorder %s30, 0
      %p200 = por %p198, %p199
      %p201 = scmp.ne.s32.totalorder %s193, %s195
      %p202 = scmp.eq.s32.totalorder %s35, 3
      %p203 = por %p201, %p202
      %p204 = scmp.ne.s32.totalorder %s195, %s196
      %p205 = scmp.eq.s32.totalorder %s35, 0
      %p206 = por %p204, %p205
      %p207 = scmp.ne.s32.totalorder %s195, %s196
      %p208 = scmp.eq.s32.totalorder %s36, 3
      %p209 = por %p207, %p208
      %p211 = scmp.ne.s32.totalorder %s196, %s210
      %p212 = scmp.eq.s32.totalorder %s36, 0
      %p213 = por %p211, %p212
      %s214 = ssub.s32 %s37, %s49
      %s215 = ssub.s32 %s38, %s45
      %s216 = sor.u32 %s214, %s215
      %p217 = scmp.eq.s32.totalorder %s216, 0
      %s219 = sadd.s32 %s218, 1
      %s220 = scalar_select %p217, %s218, %s219
      %p223 = pneg %p217
      %p224 = scmp.eq.s32.totalorder %s30, 3
      %p225 = por %p223, %p224
      %p226 = scmp.ne.s32.totalorder %s218, %s221
      %p227 = scmp.eq.s32.totalorder %s30, 0
      %p228 = por %p226, %p227
      %p229 = scmp.ne.s32.totalorder %s218, %s221
      %p230 = scmp.eq.s32.totalorder %s35, 3
      %p231 = por %p229, %p230
      %p232 = scmp.ne.s32.totalorder %s221, %s222
      %p233 = scmp.eq.s32.totalorder %s35, 0
      %p234 = por %p232, %p233
      %p235 = scmp.ne.s32.totalorder %s221, %s222
      %p236 = scmp.eq.s32.totalorder %s36, 3
      %p237 = por %p235, %p236
      %p239 = scmp.ne.s32.totalorder %s222, %s238
      %p240 = scmp.eq.s32.totalorder %s36, 0
      %p241 = por %p239, %p240
      %s242 = ssub.s32 %s37, %s49
      %p243 = scmp.eq.s32.totalorder %s242, 0
      %s245 = sadd.s32 %s244, 1
      %s246 = scalar_select %p243, %s244, %s245
      %p249 = pneg %p243
      %p250 = scmp.eq.s32.totalorder %s30, 3
      %p251 = por %p249, %p250
      %p252 = scmp.ne.s32.totalorder %s244, %s247
      %p253 = scmp.eq.s32.totalorder %s30, 0
      %p254 = por %p252, %p253
      %p255 = scmp.ne.s32.totalorder %s244, %s247
      %p256 = scmp.eq.s32.totalorder %s35, 3
      %p257 = por %p255, %p256
      %p258 = scmp.ne.s32.totalorder %s247, %s248
      %p259 = scmp.eq.s32.totalorder %s35, 0
      %p260 = por %p258, %p259
      %p261 = scmp.ne.s32.totalorder %s247, %s248
      %p262 = scmp.eq.s32.totalorder %s36, 3
      %p263 = por %p261, %p262
      %p265 = scmp.ne.s32.totalorder %s248, %s264
      %p266 = scmp.eq.s32.totalorder %s36, 0
      %p267 = por %p265, %p266
      %s268 = ssub.s32 %s37, %s49
      %p269 = scmp.eq.s32.totalorder %s268, 0
      %s271 = sadd.s32 %s270, 1
      %s272 = scalar_select %p269, %s270, %s271
      %p275 = pneg %p269
      %p276 = scmp.eq.s32.totalorder %s30, 3
      %p277 = por %p275, %p276
      %p278 = scmp.ne.s32.totalorder %s270, %s273
      %p279 = scmp.eq.s32.totalorder %s30, 0
      %p280 = por %p278, %p279
      %p281 = scmp.ne.s32.totalorder %s270, %s273
      %p282 = scmp.eq.s32.totalorder %s35, 3
      %p283 = por %p281, %p282
      %p284 = scmp.ne.s32.totalorder %s273, %s274
      %p285 = scmp.eq.s32.totalorder %s35, 0
      %p286 = por %p284, %p285
      %p287 = scmp.ne.s32.totalorder %s273, %s274
      %p288 = scmp.eq.s32.totalorder %s36, 3
      %p289 = por %p287, %p288
      %p291 = scmp.ne.s32.totalorder %s274, %s290
      %p292 = scmp.eq.s32.totalorder %s36, 0
      %p293 = por %p291, %p292
      %p294 = scmp.le.s32.totalorder 1, %s30
      %p295 = scmp.lt.s32.totalorder %s30, 5
      %p296 = pnand %p294, %p295
      %p297 = pneg %p296
      // Predicated region
      $region9: #{tpu_custom_call.1} parent=5 // pred_check
        _
      $region10: #{tpu_custom_call.1} parent=5 // pred_check_branch
        %299 = sbr.rel (%p296) target = $region12
      $region11: #{tpu_custom_call.1} parent=5 // pred_region
        %s300 = ssub.s32 %s30, 1
        // Predicated region
        $region13: #{tpu_custom_call.1} parent=11 // pred_check
          %p301 = pneg %p117
        $region14: #{tpu_custom_call.1} parent=11 // pred_check_branch
          %303 = sbr.rel (%p301) target = $region16
        $region15: #{tpu_custom_call.1} parent=11 // pred_region
          %305 = vsyncadd [#allocation8], 0
          %s307 = sshll.u32 %s2, 4
          %s308 = int_to_ptr.hbm [resolvable:$true] %s307
          %s309 = sshll.u32 [#allocation9], 4
          %s310 = int_to_ptr.vmem [resolvable:$true] %s309
          %312 = dma.hbm_to_vmem [thread:$0]  %s308, 64, %s310, [#allocation8]
        $region16: #{tpu_custom_call.1} parent=11 // pred_fallthru
          _
        // Predicated region
        $region17: #{tpu_custom_call.1} parent=11 // pred_check
          %p313 = pneg %p138
        $region18: #{tpu_custom_call.1} parent=11 // pred_check_branch
          %315 = sbr.rel (%p313) target = $region20
        $region19: #{tpu_custom_call.1} parent=11 // pred_region
          %317 = vsyncadd [#allocation11], 0
          %s318 = sshll.u32 %s3, 4
          %s319 = int_to_ptr.hbm [resolvable:$true] %s318
          %s320 = sshll.u32 [#allocation10], 4
          %s321 = int_to_ptr.vmem [resolvable:$true] %s320
          %326 = dma.hbm_to_vmem [thread:$0]  %s319, 4096, %s321, [#allocation11], 64, 64, 4
        $region20: #{tpu_custom_call.1} parent=11 // pred_fallthru
          _
        // Predicated region
        $region21: #{tpu_custom_call.1} parent=11 // pred_check
          %p327 = pneg %p159
        $region22: #{tpu_custom_call.1} parent=11 // pred_check_branch
          %329 = sbr.rel (%p327) target = $region24
        $region23: #{tpu_custom_call.1} parent=11 // pred_region
          %331 = vsyncadd [#allocation11], 0
          %s333 = sshll.u32 %s4, 4
          %s334 = int_to_ptr.hbm [resolvable:$true] %s333
          %s335 = sshll.u32 [#allocation12], 4
          %s336 = int_to_ptr.vmem [resolvable:$true] %s335
          %338 = dma.hbm_to_vmem [thread:$0]  %s334, 16, %s336, [#allocation11]
        $region24: #{tpu_custom_call.1} parent=11 // pred_fallthru
          _
        // Predicated region
        $region25: #{tpu_custom_call.1} parent=11 // pred_check
          %p339 = pneg %p206
        $region26: #{tpu_custom_call.1} parent=11 // pred_check_branch
          %341 = sbr.rel (%p339) target = $region28
        $region27: #{tpu_custom_call.1} parent=11 // pred_region
          %343 = vsyncadd [#allocation14], 0
          %s345 = sshll.u32 %s6, 4
          %s346 = int_to_ptr.hbm [resolvable:$true] %s345
          %s347 = sshll.u32 [#allocation15], 4
          %s348 = int_to_ptr.vmem [resolvable:$true] %s347
          %350 = dma.hbm_to_vmem [thread:$0]  %s346, 32, %s348, [#allocation14]
        $region28: #{tpu_custom_call.1} parent=11 // pred_fallthru
          _
      $region12: #{tpu_custom_call.1} parent=5 // pred_fallthru
        _
      %p351 = scmp.lt.s32.totalorder %s30, 4
      // Predicated region
      $region29: #{tpu_custom_call.1} parent=5 // pred_check
        %p352 = pneg %p351
      $region30: #{tpu_custom_call.1} parent=5 // pred_check_branch
        %354 = sbr.rel (%p352) target = $region32
      $region31: #{tpu_custom_call.1} parent=5 // pred_region
        // Predicated region
        $region33: #{tpu_custom_call.1} parent=31 // pred_check
          %p355 = pneg %p64
        $region34: #{tpu_custom_call.1} parent=31 // pred_check_branch
          %357 = sbr.rel (%p355) target = $region36
        $region35: #{tpu_custom_call.1} parent=31 // pred_region
          %s358 = sand.u32 %s54, 1
          %s359 = scalar_lea.sflag [#allocation5], %s358
          %s360 = sand.u32 %s54, 1
          %s361 = smul.addr %s360, 128
          %s362 = scalar_lea.vmem [#allocation4], %s361
          %s363 = smul.u32 2, %s37
          %s364 = smul.u32 4, %s38
          %366 = vsyncadd %s359, 0
          %s367 = smul.addr %s363, 32
          %s368 = sadd.s32 %s364, %s367
          %s369 = smul.addr %s368, 8
          %s370 = scalar_lea.hbm %s0, %s369
          %s371 = sshll.u32 %s370, 4
          %s372 = int_to_ptr.hbm [resolvable:$true] %s371
          %s373 = sshll.u32 %s362, 4
          %s374 = int_to_ptr.vmem [resolvable:$true] %s373
          %379 = dma.hbm_to_vmem [thread:$0]  %s372, 2048, %s374, %s359, 2048, 512, 32
        $region36: #{tpu_custom_call.1} parent=31 // pred_fallthru
          _
        // Predicated region
        $region37: #{tpu_custom_call.1} parent=31 // pred_check
          %p380 = pneg %p90
        $region38: #{tpu_custom_call.1} parent=31 // pred_check_branch
          %382 = sbr.rel (%p380) target = $region40
        $region39: #{tpu_custom_call.1} parent=31 // pred_region
          %s383 = sand.u32 %s30, 1
          %s384 = scalar_lea.sflag [#allocation8], %s383
          %s385 = sand.u32 %s80, 1
          %s386 = smul.addr %s385, 1024
          %s387 = scalar_lea.vmem [#allocation7], %s386
          %s388 = smul.u32 64, %s38
          %390 = vsyncadd %s384, 0
          %s391 = smul.addr %s388, 4
          %s392 = smul.addr %s391, 4
          %s393 = scalar_lea.hbm %s1, %s392
          %s394 = sshll.u32 %s393, 4
          %s395 = int_to_ptr.hbm [resolvable:$true] %s394
          %s396 = sshll.u32 %s387, 4
          %s397 = int_to_ptr.vmem [resolvable:$true] %s396
          %402 = dma.hbm_to_vmem [thread:$0]  %s395, 16384, %s397, %s384, 256, 256, 16
        $region40: #{tpu_custom_call.1} parent=31 // pred_fallthru
          _
        // Predicated region
        $region41: #{tpu_custom_call.1} parent=31 // pred_check
          %p403 = pneg %p179
        $region42: #{tpu_custom_call.1} parent=31 // pred_check_branch
          %405 = sbr.rel (%p403) target = $region44
        $region43: #{tpu_custom_call.1} parent=31 // pred_region
          %s406 = sand.u32 %s30, 1
          %s407 = scalar_lea.sflag [#allocation14], %s406
          %s408 = sand.u32 %s169, 1
          %s409 = smul.addr %s408, 512
          %s410 = scalar_lea.vmem [#allocation13], %s409
          %s411 = smul.u32 64, %s38
          %413 = vsyncadd %s407, 0
          %s414 = smul.addr %s411, 2
          %s415 = smul.addr %s414, 4
          %s416 = scalar_lea.hbm %s5, %s415
          %s417 = sshll.u32 %s416, 4
          %s418 = int_to_ptr.hbm [resolvable:$true] %s417
          %s419 = sshll.u32 %s410, 4
          %s420 = int_to_ptr.vmem [resolvable:$true] %s419
          %425 = dma.hbm_to_vmem [thread:$0]  %s418, 8192, %s420, %s407, 128, 128, 8
        $region44: #{tpu_custom_call.1} parent=31 // pred_fallthru
          _
      $region32: #{tpu_custom_call.1} parent=5 // pred_fallthru
        _
      %p426 = scmp.le.s32.totalorder 1, %s30
      %p427 = scmp.lt.s32.totalorder %s30, 5
      %p428 = pnand %p426, %p427
      %p429 = pneg %p428
      // Predicated region
      $region45: #{tpu_custom_call.1} parent=5 // pred_check
        _
      $region46: #{tpu_custom_call.1} parent=5 // pred_check_branch
        %431 = sbr.rel (%p428) target = $region48
      $region47: #{tpu_custom_call.1} parent=5 // pred_region
        %s432 = ssub.s32 %s30, 1
        %s433 = sand.u32 %s57, 1
        %s434 = scalar_lea.sflag [#allocation5], %s433
        %s435 = sand.u32 %s57, 1
        %s436 = smul.addr %s435, 128
        %s437 = scalar_lea.vmem [#allocation4], %s436
        // Predicated region
        $region49: #{tpu_custom_call.1} parent=47 // pred_check
          %p438 = pneg %p70
        $region50: #{tpu_custom_call.1} parent=47 // pred_check_branch
          %440 = sbr.rel (%p438) target = $region52
        $region51: #{tpu_custom_call.1} parent=47 // pred_region
          %442 = dma.done %s434, 2048
        $region52: #{tpu_custom_call.1} parent=47 // pred_fallthru
          _
        %s443 = sand.u32 %s35, 1
        %s444 = scalar_lea.sflag [#allocation8], %s443
        %s445 = sand.u32 %s83, 1
        %s446 = smul.addr %s445, 1024
        %s447 = scalar_lea.vmem [#allocation7], %s446
        // Predicated region
        $region53: #{tpu_custom_call.1} parent=47 // pred_check
          %p448 = pneg %p96
        $region54: #{tpu_custom_call.1} parent=47 // pred_check_branch
          %450 = sbr.rel (%p448) target = $region56
        $region55: #{tpu_custom_call.1} parent=47 // pred_region
          %452 = dma.done %s444, 16384
        $region56: #{tpu_custom_call.1} parent=47 // pred_fallthru
          _
        // Predicated region
        $region57: #{tpu_custom_call.1} parent=47 // pred_check
          %p453 = pneg %p117
        $region58: #{tpu_custom_call.1} parent=47 // pred_check_branch
          %455 = sbr.rel (%p453) target = $region60
        $region59: #{tpu_custom_call.1} parent=47 // pred_region
          %457 = dma.done [#allocation8], 64
        $region60: #{tpu_custom_call.1} parent=47 // pred_fallthru
          _
        // Predicated region
        $region61: #{tpu_custom_call.1} parent=47 // pred_check
          %p458 = pneg %p138
        $region62: #{tpu_custom_call.1} parent=47 // pred_check_branch
          %460 = sbr.rel (%p458) target = $region64
        $region63: #{tpu_custom_call.1} parent=47 // pred_region
          %462 = dma.done [#allocation11], 4096
        $region64: #{tpu_custom_call.1} parent=47 // pred_fallthru
          _
        // Predicated region
        $region65: #{tpu_custom_call.1} parent=47 // pred_check
          %p463 = pneg %p159
        $region66: #{tpu_custom_call.1} parent=47 // pred_check_branch
          %465 = sbr.rel (%p463) target = $region68
        $region67: #{tpu_custom_call.1} parent=47 // pred_region
          %467 = dma.done [#allocation11], 16
        $region68: #{tpu_custom_call.1} parent=47 // pred_fallthru
          _
        %s468 = sand.u32 %s35, 1
        %s469 = scalar_lea.sflag [#allocation14], %s468
        %s470 = sand.u32 %s172, 1
        %s471 = smul.addr %s470, 512
        %s472 = scalar_lea.vmem [#allocation13], %s471
        // Predicated region
        $region69: #{tpu_custom_call.1} parent=47 // pred_check
          %p473 = pneg %p185
        $region70: #{tpu_custom_call.1} parent=47 // pred_check_branch
          %475 = sbr.rel (%p473) target = $region72
        $region71: #{tpu_custom_call.1} parent=47 // pred_region
          %477 = dma.done %s469, 8192
        $region72: #{tpu_custom_call.1} parent=47 // pred_fallthru
          _
        // Predicated region
        $region73: #{tpu_custom_call.1} parent=47 // pred_check
          %p478 = pneg %p206
        $region74: #{tpu_custom_call.1} parent=47 // pred_check_branch
          %480 = sbr.rel (%p478) target = $region76
        $region75: #{tpu_custom_call.1} parent=47 // pred_region
          %482 = dma.done [#allocation14], 32
        $region76: #{tpu_custom_call.1} parent=47 // pred_fallthru
          _
        %s483 = sand.u32 %s57, 1
        %s484 = scalar_lea.sflag [#allocation5], %s483
        %s485 = sand.u32 %s57, 1
        %s486 = smul.addr %s485, 128
        %s487 = scalar_lea.vmem [#allocation4], %s486
        %p488 = pneg %p70
        %p489 = pneg %p67
        %s490 = sand.u32 %s35, 1
        %s491 = scalar_lea.sflag [#allocation8], %s490
        %s492 = sand.u32 %s83, 1
        %s493 = smul.addr %s492, 1024
        %s494 = scalar_lea.vmem [#allocation7], %s493
        %p495 = pneg %p96
        %p496 = pneg %p93
        %p497 = pneg %p117
        %p498 = pneg %p114
        %p499 = pneg %p138
        %p500 = pneg %p135
        %p501 = pneg %p159
        %p502 = pneg %p156
        %s503 = sand.u32 %s35, 1
        %s504 = scalar_lea.sflag [#allocation14], %s503
        %s505 = sand.u32 %s172, 1
        %s506 = smul.addr %s505, 512
        %s507 = scalar_lea.vmem [#allocation13], %s506
        %p508 = pneg %p185
        %p509 = pneg %p182
        %p510 = pneg %p206
        %p511 = pneg %p203
        %p512 = pneg %p234
        %p513 = pneg %p231
        %s514 = sand.u32 %s221, 1
        %s515 = scalar_lea.sflag [#allocation6], %s514
        %s516 = sand.u32 %s221, 1
        %s517 = smul.addr %s516, 8
        %s518 = scalar_lea.vmem [#allocation16], %s517
        %p519 = pneg %p260
        %p520 = pneg %p257
        %p521 = pneg %p286
        %p522 = pneg %p283
        %s523 = smul.u32 2, %s39
        %s524 = smul.u32 4, %s40
        %s525 = smul.u32 64, %s40
        %s526 = smul.u32 64, %s40
        %s527 = smul.u32 4, %s40
        %p528 = scmp.eq.s32.totalorder %s40, 0
        // Predicated region
        $region77: #{tpu_custom_call.1} parent=47 // pred_check
          %p529 = pneg %p528
        $region78: #{tpu_custom_call.1} parent=47 // pred_check_branch
          %531 = sbr.rel (%p529) target = $region80
        $region79: #{tpu_custom_call.1} parent=47 // pred_region
          %532 = vst [vmem:[#allocation2] sm:$0xff] 0.0
          %533 = vst [vmem:[#allocation3] sm:$0xff] 0.0
          %534 = vst [vmem:[#allocation3 + $0x8] sm:$0xff] 0.0
          %535 = vst [vmem:[#allocation3 + $0x10] sm:$0xff] 0.0
          %536 = vst [vmem:[#allocation3 + $0x18] sm:$0xff] 0.0
          %537 = vst [vmem:[#allocation3 + $0x20] sm:$0xff] 0.0
          %538 = vst [vmem:[#allocation3 + $0x28] sm:$0xff] 0.0
          %539 = vst [vmem:[#allocation3 + $0x30] sm:$0xff] 0.0
          %540 = vst [vmem:[#allocation3 + $0x38] sm:$0xff] 0.0
        $region80: #{tpu_custom_call.1} parent=47 // pred_fallthru
          _
        %v541 = vld [vmem:[%s437] sm:$0xff]
        %v542 = vld [vmem:[%s437 + $0x8] sm:$0xff]
        %v543 = vld [vmem:[%s437 + $0x10] sm:$0xff]
        %v544 = vld [vmem:[%s437 + $0x18] sm:$0xff]
        %v545 = vld [vmem:[%s437 + $0x20] sm:$0xff]
        %v546 = vld [vmem:[%s437 + $0x28] sm:$0xff]
        %v547 = vld [vmem:[%s437 + $0x30] sm:$0xff]
        %v548 = vld [vmem:[%s437 + $0x38] sm:$0xff]
        %v549 = vld [vmem:[%s437 + $0x40] sm:$0xff]
        %v550 = vld [vmem:[%s437 + $0x48] sm:$0xff]
        %v551 = vld [vmem:[%s437 + $0x50] sm:$0xff]
        %v552 = vld [vmem:[%s437 + $0x58] sm:$0xff]
        %v553 = vld [vmem:[%s437 + $0x60] sm:$0xff]
        %v554 = vld [vmem:[%s437 + $0x68] sm:$0xff]
        %v555 = vld [vmem:[%s437 + $0x70] sm:$0xff]
        %v556 = vld [vmem:[%s437 + $0x78] sm:$0xff]
        %v557 = vadd.f32 %v541, %v545
        %v558 = vrot.slane %v557, 4
        %v559 = vadd.f32 %v557, %v558
        %v560 = vrot.slane %v559, 2
        %v561 = vadd.f32 %v559, %v560
        %v562 = vrot.slane %v561, 1
        %v563 = vadd.f32 %v561, %v562
        %v564 = vadd.f32 %v542, %v546
        %v565 = vrot.slane %v564, 4
        %v566 = vadd.f32 %v564, %v565
        %v567 = vrot.slane %v566, 2
        %v568 = vadd.f32 %v566, %v567
        %v569 = vrot.slane %v568, 1
        %v570 = vadd.f32 %v568, %v569
        %v571 = vadd.f32 %v543, %v547
        %v572 = vrot.slane %v571, 4
        %v573 = vadd.f32 %v571, %v572
        %v574 = vrot.slane %v573, 2
        %v575 = vadd.f32 %v573, %v574
        %v576 = vrot.slane %v575, 1
        %v577 = vadd.f32 %v575, %v576
        %v578 = vadd.f32 %v544, %v548
        %v579 = vrot.slane %v578, 4
        %v580 = vadd.f32 %v578, %v579
        %v581 = vrot.slane %v580, 2
        %v582 = vadd.f32 %v580, %v581
        %v583 = vrot.slane %v582, 1
        %v584 = vadd.f32 %v582, %v583
        %v585 = vadd.f32 %v549, %v553
        %v586 = vrot.slane %v585, 4
        %v587 = vadd.f32 %v585, %v586
        %v588 = vrot.slane %v587, 2
        %v589 = vadd.f32 %v587, %v588
        %v590 = vrot.slane %v589, 1
        %v591 = vadd.f32 %v589, %v590
        %v592 = vadd.f32 %v550, %v554
        %v593 = vrot.slane %v592, 4
        %v594 = vadd.f32 %v592, %v593
        %v595 = vrot.slane %v594, 2
        %v596 = vadd.f32 %v594, %v595
        %v597 = vrot.slane %v596, 1
        %v598 = vadd.f32 %v596, %v597
        %v599 = vadd.f32 %v551, %v555
        %v600 = vrot.slane %v599, 4
        %v601 = vadd.f32 %v599, %v600
        %v602 = vrot.slane %v601, 2
        %v603 = vadd.f32 %v601, %v602
        %v604 = vrot.slane %v603, 1
        %v605 = vadd.f32 %v603, %v604
        %v606 = vadd.f32 %v552, %v556
        %v607 = vrot.slane %v606, 4
        %v608 = vadd.f32 %v606, %v607
        %v609 = vrot.slane %v608, 2
        %v610 = vadd.f32 %v608, %v609
        %v611 = vrot.slane %v610, 1
        %v612 = vadd.f32 %v610, %v611
        %v613 = vrcp.pop 16.0
        %v614 = vmul.f32 16.0, %v613
        %v615 = vsub.f32 1.0, %v614
        %v616 = vmul.f32 %v613, %v615
        %v617 = vadd.f32 %v613, %v616
        %vm618 = vweird.f32 %v613
        %v619 = vsel %vm618, %v613, %v617
        %v620 = vmul.f32 %v563, %v619
        %v621 = vmul.f32 %v570, %v619
        %v622 = vmul.f32 %v577, %v619
        %v623 = vmul.f32 %v584, %v619
        %v624 = vmul.f32 %v591, %v619
        %v625 = vmul.f32 %v598, %v619
        %v626 = vmul.f32 %v605, %v619
        %v627 = vmul.f32 %v612, %v619
        %v636 = vrot.slane %v621, 6
        %v637 = vrot.slane %v622, 4
        %v638 = vrot.slane %v623, 2
        %v639 = vrot.slane %v625, 6
        %v640 = vrot.slane %v626, 4
        %v641 = vrot.slane %v627, 2
        %vm642 = vcmask 1041408
        %v643 = vsel %vm642, %v620, %v636
        %vm644 = vcmask 1045508
        %v645 = vsel %vm644, %v637, %v638
        %vm646 = vcmask 1043456
        %v647 = vsel %vm646, %v643, %v645
        %v648 = vsel %vm642, %v624, %v639
        %v649 = vsel %vm644, %v640, %v641
        %v650 = vsel %vm646, %v648, %v649
        %vm651 = vcmask 1044484
        %v652 = vsel %vm651, %v647, %v647
        %vm653 = vcmask 1046534
        %v654 = vsel %vm653, %v647, %v652
        %v655 = vrot.slane %v650, 7
        %vm656 = vcmask 1041409
        %v657 = vsel %vm656, %v655, %v654
        %vm658 = vcmask 1043459
        %v659 = vsel %vm658, %v655, %v657
        %vm660 = vcmask 1045509
        %v661 = vsel %vm660, %v655, %v659
        %vm662 = vcmask 1047559
        %v663 = vsel %vm662, %v655, %v661
        %665 = vst [vmem:[%s518] sm:$0xff] %v663
        %v666 = vld [vmem:[#allocation2] sm:$0xff]
        %v667 = vpack.c.bf16 %v620, %v620
        %v668 = vpack.c.bf16 %v621, %v621
        %v669 = vpack.c.bf16 %v622, %v622
        %v670 = vpack.c.bf16 %v623, %v623
        %v671 = vpack.c.bf16 %v624, %v624
        %v672 = vpack.c.bf16 %v625, %v625
        %v673 = vpack.c.bf16 %v626, %v626
        %v674 = vpack.c.bf16 %v627, %v627
        %v675 = vld [vmem:[%s447] sm:$0xff]
        %v676 = vld [vmem:[%s447 + $0x8] sm:$0xff]
        %v677 = vld [vmem:[%s447 + $0x10] sm:$0xff]
        %v678 = vld [vmem:[%s447 + $0x18] sm:$0xff]
        %v679 = vld [vmem:[%s447 + $0x20] sm:$0xff]
        %v680 = vld [vmem:[%s447 + $0x28] sm:$0xff]
        %v681 = vld [vmem:[%s447 + $0x30] sm:$0xff]
        %v682 = vld [vmem:[%s447 + $0x38] sm:$0xff]
        %v683 = vld [vmem:[%s447 + $0x40] sm:$0xff]
        %v684 = vld [vmem:[%s447 + $0x48] sm:$0xff]
        %v685 = vld [vmem:[%s447 + $0x50] sm:$0xff]
        %v686 = vld [vmem:[%s447 + $0x58] sm:$0xff]
        %v687 = vld [vmem:[%s447 + $0x60] sm:$0xff]
        %v688 = vld [vmem:[%s447 + $0x68] sm:$0xff]
        %v689 = vld [vmem:[%s447 + $0x70] sm:$0xff]
        %v690 = vld [vmem:[%s447 + $0x78] sm:$0xff]
        %v691 = vld [vmem:[%s447 + $0x80] sm:$0xff]
        %v692 = vld [vmem:[%s447 + $0x88] sm:$0xff]
        %v693 = vld [vmem:[%s447 + $0x90] sm:$0xff]
        %v694 = vld [vmem:[%s447 + $0x98] sm:$0xff]
        %v695 = vld [vmem:[%s447 + $0xa0] sm:$0xff]
        %v696 = vld [vmem:[%s447 + $0xa8] sm:$0xff]
        %v697 = vld [vmem:[%s447 + $0xb0] sm:$0xff]
        %v698 = vld [vmem:[%s447 + $0xb8] sm:$0xff]
        %v699 = vld [vmem:[%s447 + $0xc0] sm:$0xff]
        %v700 = vld [vmem:[%s447 + $0xc8] sm:$0xff]
        %v701 = vld [vmem:[%s447 + $0xd0] sm:$0xff]
        %v702 = vld [vmem:[%s447 + $0xd8] sm:$0xff]
        %v703 = vld [vmem:[%s447 + $0xe0] sm:$0xff]
        %v704 = vld [vmem:[%s447 + $0xe8] sm:$0xff]
        %v705 = vld [vmem:[%s447 + $0xf0] sm:$0xff]
        %v706 = vld [vmem:[%s447 + $0xf8] sm:$0xff]
        %v707 = vld [vmem:[%s447 + $0x100] sm:$0xff]
        %v708 = vld [vmem:[%s447 + $0x108] sm:$0xff]
        %v709 = vld [vmem:[%s447 + $0x110] sm:$0xff]
        %v710 = vld [vmem:[%s447 + $0x118] sm:$0xff]
        %v711 = vld [vmem:[%s447 + $0x120] sm:$0xff]
        %v712 = vld [vmem:[%s447 + $0x128] sm:$0xff]
        %v713 = vld [vmem:[%s447 + $0x130] sm:$0xff]
        %v714 = vld [vmem:[%s447 + $0x138] sm:$0xff]
        %v715 = vld [vmem:[%s447 + $0x140] sm:$0xff]
        %v716 = vld [vmem:[%s447 + $0x148] sm:$0xff]
        %v717 = vld [vmem:[%s447 + $0x150] sm:$0xff]
        %v718 = vld [vmem:[%s447 + $0x158] sm:$0xff]
        %v719 = vld [vmem:[%s447 + $0x160] sm:$0xff]
        %v720 = vld [vmem:[%s447 + $0x168] sm:$0xff]
        %v721 = vld [vmem:[%s447 + $0x170] sm:$0xff]
        %v722 = vld [vmem:[%s447 + $0x178] sm:$0xff]
        %v723 = vld [vmem:[%s447 + $0x180] sm:$0xff]
        %v724 = vld [vmem:[%s447 + $0x188] sm:$0xff]
        %v725 = vld [vmem:[%s447 + $0x190] sm:$0xff]
        %v726 = vld [vmem:[%s447 + $0x198] sm:$0xff]
        %v727 = vld [vmem:[%s447 + $0x1a0] sm:$0xff]
        %v728 = vld [vmem:[%s447 + $0x1a8] sm:$0xff]
        %v729 = vld [vmem:[%s447 + $0x1b0] sm:$0xff]
        %v730 = vld [vmem:[%s447 + $0x1b8] sm:$0xff]
        %v731 = vld [vmem:[%s447 + $0x1c0] sm:$0xff]
        %v732 = vld [vmem:[%s447 + $0x1c8] sm:$0xff]
        %v733 = vld [vmem:[%s447 + $0x1d0] sm:$0xff]
        %v734 = vld [vmem:[%s447 + $0x1d8] sm:$0xff]
        %v735 = vld [vmem:[%s447 + $0x1e0] sm:$0xff]
        %v736 = vld [vmem:[%s447 + $0x1e8] sm:$0xff]
        %v737 = vld [vmem:[%s447 + $0x1f0] sm:$0xff]
        %v738 = vld [vmem:[%s447 + $0x1f8] sm:$0xff]
        %v739 = vld [vmem:[%s447 + $0x200] sm:$0xff]
        %v740 = vld [vmem:[%s447 + $0x208] sm:$0xff]
        %v741 = vld [vmem:[%s447 + $0x210] sm:$0xff]
        %v742 = vld [vmem:[%s447 + $0x218] sm:$0xff]
        %v743 = vld [vmem:[%s447 + $0x220] sm:$0xff]
        %v744 = vld [vmem:[%s447 + $0x228] sm:$0xff]
        %v745 = vld [vmem:[%s447 + $0x230] sm:$0xff]
        %v746 = vld [vmem:[%s447 + $0x238] sm:$0xff]
        %v747 = vld [vmem:[%s447 + $0x240] sm:$0xff]
        %v748 = vld [vmem:[%s447 + $0x248] sm:$0xff]
        %v749 = vld [vmem:[%s447 + $0x250] sm:$0xff]
        %v750 = vld [vmem:[%s447 + $0x258] sm:$0xff]
        %v751 = vld [vmem:[%s447 + $0x260] sm:$0xff]
        %v752 = vld [vmem:[%s447 + $0x268] sm:$0xff]
        %v753 = vld [vmem:[%s447 + $0x270] sm:$0xff]
        %v754 = vld [vmem:[%s447 + $0x278] sm:$0xff]
        %v755 = vld [vmem:[%s447 + $0x280] sm:$0xff]
        %v756 = vld [vmem:[%s447 + $0x288] sm:$0xff]
        %v757 = vld [vmem:[%s447 + $0x290] sm:$0xff]
        %v758 = vld [vmem:[%s447 + $0x298] sm:$0xff]
        %v759 = vld [vmem:[%s447 + $0x2a0] sm:$0xff]
        %v760 = vld [vmem:[%s447 + $0x2a8] sm:$0xff]
        %v761 = vld [vmem:[%s447 + $0x2b0] sm:$0xff]
        %v762 = vld [vmem:[%s447 + $0x2b8] sm:$0xff]
        %v763 = vld [vmem:[%s447 + $0x2c0] sm:$0xff]
        %v764 = vld [vmem:[%s447 + $0x2c8] sm:$0xff]
        %v765 = vld [vmem:[%s447 + $0x2d0] sm:$0xff]
        %v766 = vld [vmem:[%s447 + $0x2d8] sm:$0xff]
        %v767 = vld [vmem:[%s447 + $0x2e0] sm:$0xff]
        %v768 = vld [vmem:[%s447 + $0x2e8] sm:$0xff]
        %v769 = vld [vmem:[%s447 + $0x2f0] sm:$0xff]
        %v770 = vld [vmem:[%s447 + $0x2f8] sm:$0xff]
        %v771 = vld [vmem:[%s447 + $0x300] sm:$0xff]
        %v772 = vld [vmem:[%s447 + $0x308] sm:$0xff]
        %v773 = vld [vmem:[%s447 + $0x310] sm:$0xff]
        %v774 = vld [vmem:[%s447 + $0x318] sm:$0xff]
        %v775 = vld [vmem:[%s447 + $0x320] sm:$0xff]
        %v776 = vld [vmem:[%s447 + $0x328] sm:$0xff]
        %v777 = vld [vmem:[%s447 + $0x330] sm:$0xff]
        %v778 = vld [vmem:[%s447 + $0x338] sm:$0xff]
        %v779 = vld [vmem:[%s447 + $0x340] sm:$0xff]
        %v780 = vld [vmem:[%s447 + $0x348] sm:$0xff]
        %v781 = vld [vmem:[%s447 + $0x350] sm:$0xff]
        %v782 = vld [vmem:[%s447 + $0x358] sm:$0xff]
        %v783 = vld [vmem:[%s447 + $0x360] sm:$0xff]
        %v784 = vld [vmem:[%s447 + $0x368] sm:$0xff]
        %v785 = vld [vmem:[%s447 + $0x370] sm:$0xff]
        %v786 = vld [vmem:[%s447 + $0x378] sm:$0xff]
        %v787 = vld [vmem:[%s447 + $0x380] sm:$0xff]
        %v788 = vld [vmem:[%s447 + $0x388] sm:$0xff]
        %v789 = vld [vmem:[%s447 + $0x390] sm:$0xff]
        %v790 = vld [vmem:[%s447 + $0x398] sm:$0xff]
        %v791 = vld [vmem:[%s447 + $0x3a0] sm:$0xff]
        %v792 = vld [vmem:[%s447 + $0x3a8] sm:$0xff]
        %v793 = vld [vmem:[%s447 + $0x3b0] sm:$0xff]
        %v794 = vld [vmem:[%s447 + $0x3b8] sm:$0xff]
        %v795 = vld [vmem:[%s447 + $0x3c0] sm:$0xff]
        %v796 = vld [vmem:[%s447 + $0x3c8] sm:$0xff]
        %v797 = vld [vmem:[%s447 + $0x3d0] sm:$0xff]
        %v798 = vld [vmem:[%s447 + $0x3d8] sm:$0xff]
        %v799 = vld [vmem:[%s447 + $0x3e0] sm:$0xff]
        %v800 = vld [vmem:[%s447 + $0x3e8] sm:$0xff]
        %v801 = vld [vmem:[%s447 + $0x3f0] sm:$0xff]
        %v802 = vld [vmem:[%s447 + $0x3f8] sm:$0xff]
        %v811 = vunpack.c.l.b16 %v667
        %v812 = vunpack.c.l.b16 %v668
        %v813 = vunpack.c.l.b16 %v669
        %v814 = vunpack.c.l.b16 %v670
        %v815 = vunpack.c.l.b16 %v671
        %v816 = vunpack.c.l.b16 %v672
        %v817 = vunpack.c.l.b16 %v673
        %v818 = vunpack.c.l.b16 %v674
        %v819 = vsel %vm656, %v815, %v811
        %v820 = vsel %vm656, %v816, %v812
        %v821 = vsel %vm656, %v817, %v813
        %v822 = vsel %vm656, %v818, %v814
        %v823 = vpack.c.b16 %v819, %v819
        %v824 = vpack.c.b16 %v820, %v820
        %v825 = vpack.c.b16 %v821, %v821
        %v826 = vpack.c.b16 %v822, %v822
        %v959 = vunpack.c.l.b16 %v675
        %v960 = vunpack.c.h.b16 %v675
        %v961 = vunpack.c.l.b16 %v676
        %v962 = vunpack.c.h.b16 %v676
        %v963 = vunpack.c.l.b16 %v677
        %v964 = vunpack.c.h.b16 %v677
        %v965 = vunpack.c.l.b16 %v678
        %v966 = vunpack.c.h.b16 %v678
        %v967 = vunpack.c.l.b16 %v679
        %v968 = vunpack.c.h.b16 %v679
        %v969 = vunpack.c.l.b16 %v680
        %v970 = vunpack.c.h.b16 %v680
        %v971 = vunpack.c.l.b16 %v681
        %v972 = vunpack.c.h.b16 %v681
        %v973 = vunpack.c.l.b16 %v682
        %v974 = vunpack.c.h.b16 %v682
        %v975 = vunpack.c.l.b16 %v683
        %v976 = vunpack.c.h.b16 %v683
        %v977 = vunpack.c.l.b16 %v684
        %v978 = vunpack.c.h.b16 %v684
        %v979 = vunpack.c.l.b16 %v685
        %v980 = vunpack.c.h.b16 %v685
        %v981 = vunpack.c.l.b16 %v686
        %v982 = vunpack.c.h.b16 %v686
        %v983 = vunpack.c.l.b16 %v687
        %v984 = vunpack.c.h.b16 %v687
        %v985 = vunpack.c.l.b16 %v688
        %v986 = vunpack.c.h.b16 %v688
        %v987 = vunpack.c.l.b16 %v689
        %v988 = vunpack.c.h.b16 %v689
        %v989 = vunpack.c.l.b16 %v690
        %v990 = vunpack.c.h.b16 %v690
        %v991 = vunpack.c.l.b16 %v691
        %v992 = vunpack.c.h.b16 %v691
        %v993 = vunpack.c.l.b16 %v692
        %v994 = vunpack.c.h.b16 %v692
        %v995 = vunpack.c.l.b16 %v693
        %v996 = vunpack.c.h.b16 %v693
        %v997 = vunpack.c.l.b16 %v694
        %v998 = vunpack.c.h.b16 %v694
        %v999 = vunpack.c.l.b16 %v695
        %v1000 = vunpack.c.h.b16 %v695
        %v1001 = vunpack.c.l.b16 %v696
        %v1002 = vunpack.c.h.b16 %v696
        %v1003 = vunpack.c.l.b16 %v697
        %v1004 = vunpack.c.h.b16 %v697
        %v1005 = vunpack.c.l.b16 %v698
        %v1006 = vunpack.c.h.b16 %v698
        %v1007 = vunpack.c.l.b16 %v699
        %v1008 = vunpack.c.h.b16 %v699
        %v1009 = vunpack.c.l.b16 %v700
        %v1010 = vunpack.c.h.b16 %v700
        %v1011 = vunpack.c.l.b16 %v701
        %v1012 = vunpack.c.h.b16 %v701
        %v1013 = vunpack.c.l.b16 %v702
        %v1014 = vunpack.c.h.b16 %v702
        %v1015 = vunpack.c.l.b16 %v703
        %v1016 = vunpack.c.h.b16 %v703
        %v1017 = vunpack.c.l.b16 %v704
        %v1018 = vunpack.c.h.b16 %v704
        %v1019 = vunpack.c.l.b16 %v705
        %v1020 = vunpack.c.h.b16 %v705
        %v1021 = vunpack.c.l.b16 %v706
        %v1022 = vunpack.c.h.b16 %v706
        %v1023 = vunpack.c.l.b16 %v707
        %v1024 = vunpack.c.h.b16 %v707
        %v1025 = vunpack.c.l.b16 %v708
        %v1026 = vunpack.c.h.b16 %v708
        %v1027 = vunpack.c.l.b16 %v709
        %v1028 = vunpack.c.h.b16 %v709
        %v1029 = vunpack.c.l.b16 %v710
        %v1030 = vunpack.c.h.b16 %v710
        %v1031 = vunpack.c.l.b16 %v711
        %v1032 = vunpack.c.h.b16 %v711
        %v1033 = vunpack.c.l.b16 %v712
        %v1034 = vunpack.c.h.b16 %v712
        %v1035 = vunpack.c.l.b16 %v713
        %v1036 = vunpack.c.h.b16 %v713
        %v1037 = vunpack.c.l.b16 %v714
        %v1038 = vunpack.c.h.b16 %v714
        %v1039 = vunpack.c.l.b16 %v715
        %v1040 = vunpack.c.h.b16 %v715
        %v1041 = vunpack.c.l.b16 %v716
        %v1042 = vunpack.c.h.b16 %v716
        %v1043 = vunpack.c.l.b16 %v717
        %v1044 = vunpack.c.h.b16 %v717
        %v1045 = vunpack.c.l.b16 %v718
        %v1046 = vunpack.c.h.b16 %v718
        %v1047 = vunpack.c.l.b16 %v719
        %v1048 = vunpack.c.h.b16 %v719
        %v1049 = vunpack.c.l.b16 %v720
        %v1050 = vunpack.c.h.b16 %v720
        %v1051 = vunpack.c.l.b16 %v721
        %v1052 = vunpack.c.h.b16 %v721
        %v1053 = vunpack.c.l.b16 %v722
        %v1054 = vunpack.c.h.b16 %v722
        %v1055 = vunpack.c.l.b16 %v723
        %v1056 = vunpack.c.h.b16 %v723
        %v1057 = vunpack.c.l.b16 %v724
        %v1058 = vunpack.c.h.b16 %v724
        %v1059 = vunpack.c.l.b16 %v725
        %v1060 = vunpack.c.h.b16 %v725
        %v1061 = vunpack.c.l.b16 %v726
        %v1062 = vunpack.c.h.b16 %v726
        %v1063 = vunpack.c.l.b16 %v727
        %v1064 = vunpack.c.h.b16 %v727
        %v1065 = vunpack.c.l.b16 %v728
        %v1066 = vunpack.c.h.b16 %v728
        %v1067 = vunpack.c.l.b16 %v729
        %v1068 = vunpack.c.h.b16 %v729
        %v1069 = vunpack.c.l.b16 %v730
        %v1070 = vunpack.c.h.b16 %v730
        %v1071 = vunpack.c.l.b16 %v731
        %v1072 = vunpack.c.h.b16 %v731
        %v1073 = vunpack.c.l.b16 %v732
        %v1074 = vunpack.c.h.b16 %v732
        %v1075 = vunpack.c.l.b16 %v733
        %v1076 = vunpack.c.h.b16 %v733
        %v1077 = vunpack.c.l.b16 %v734
        %v1078 = vunpack.c.h.b16 %v734
        %v1079 = vunpack.c.l.b16 %v735
        %v1080 = vunpack.c.h.b16 %v735
        %v1081 = vunpack.c.l.b16 %v736
        %v1082 = vunpack.c.h.b16 %v736
        %v1083 = vunpack.c.l.b16 %v737
        %v1084 = vunpack.c.h.b16 %v737
        %v1085 = vunpack.c.l.b16 %v738
        %v1086 = vunpack.c.h.b16 %v738
        %v1087 = vunpack.c.l.b16 %v739
        %v1088 = vunpack.c.h.b16 %v739
        %v1089 = vunpack.c.l.b16 %v740
        %v1090 = vunpack.c.h.b16 %v740
        %v1091 = vunpack.c.l.b16 %v741
        %v1092 = vunpack.c.h.b16 %v741
        %v1093 = vunpack.c.l.b16 %v742
        %v1094 = vunpack.c.h.b16 %v742
        %v1095 = vunpack.c.l.b16 %v743
        %v1096 = vunpack.c.h.b16 %v743
        %v1097 = vunpack.c.l.b16 %v744
        %v1098 = vunpack.c.h.b16 %v744
        %v1099 = vunpack.c.l.b16 %v745
        %v1100 = vunpack.c.h.b16 %v745
        %v1101 = vunpack.c.l.b16 %v746
        %v1102 = vunpack.c.h.b16 %v746
        %v1103 = vunpack.c.l.b16 %v747
        %v1104 = vunpack.c.h.b16 %v747
        %v1105 = vunpack.c.l.b16 %v748
        %v1106 = vunpack.c.h.b16 %v748
        %v1107 = vunpack.c.l.b16 %v749
        %v1108 = vunpack.c.h.b16 %v749
        %v1109 = vunpack.c.l.b16 %v750
        %v1110 = vunpack.c.h.b16 %v750
        %v1111 = vunpack.c.l.b16 %v751
        %v1112 = vunpack.c.h.b16 %v751
        %v1113 = vunpack.c.l.b16 %v752
        %v1114 = vunpack.c.h.b16 %v752
        %v1115 = vunpack.c.l.b16 %v753
        %v1116 = vunpack.c.h.b16 %v753
        %v1117 = vunpack.c.l.b16 %v754
        %v1118 = vunpack.c.h.b16 %v754
        %v1119 = vunpack.c.l.b16 %v755
        %v1120 = vunpack.c.h.b16 %v755
        %v1121 = vunpack.c.l.b16 %v756
        %v1122 = vunpack.c.h.b16 %v756
        %v1123 = vunpack.c.l.b16 %v757
        %v1124 = vunpack.c.h.b16 %v757
        %v1125 = vunpack.c.l.b16 %v758
        %v1126 = vunpack.c.h.b16 %v758
        %v1127 = vunpack.c.l.b16 %v759
        %v1128 = vunpack.c.h.b16 %v759
        %v1129 = vunpack.c.l.b16 %v760
        %v1130 = vunpack.c.h.b16 %v760
        %v1131 = vunpack.c.l.b16 %v761
        %v1132 = vunpack.c.h.b16 %v761
        %v1133 = vunpack.c.l.b16 %v762
        %v1134 = vunpack.c.h.b16 %v762
        %v1135 = vunpack.c.l.b16 %v763
        %v1136 = vunpack.c.h.b16 %v763
        %v1137 = vunpack.c.l.b16 %v764
        %v1138 = vunpack.c.h.b16 %v764
        %v1139 = vunpack.c.l.b16 %v765
        %v1140 = vunpack.c.h.b16 %v765
        %v1141 = vunpack.c.l.b16 %v766
        %v1142 = vunpack.c.h.b16 %v766
        %v1143 = vunpack.c.l.b16 %v767
        %v1144 = vunpack.c.h.b16 %v767
        %v1145 = vunpack.c.l.b16 %v768
        %v1146 = vunpack.c.h.b16 %v768
        %v1147 = vunpack.c.l.b16 %v769
        %v1148 = vunpack.c.h.b16 %v769
        %v1149 = vunpack.c.l.b16 %v770
        %v1150 = vunpack.c.h.b16 %v770
        %v1151 = vunpack.c.l.b16 %v771
        %v1152 = vunpack.c.h.b16 %v771
        %v1153 = vunpack.c.l.b16 %v772
        %v1154 = vunpack.c.h.b16 %v772
        %v1155 = vunpack.c.l.b16 %v773
        %v1156 = vunpack.c.h.b16 %v773
        %v1157 = vunpack.c.l.b16 %v774
        %v1158 = vunpack.c.h.b16 %v774
        %v1159 = vunpack.c.l.b16 %v775
        %v1160 = vunpack.c.h.b16 %v775
        %v1161 = vunpack.c.l.b16 %v776
        %v1162 = vunpack.c.h.b16 %v776
        %v1163 = vunpack.c.l.b16 %v777
        %v1164 = vunpack.c.h.b16 %v777
        %v1165 = vunpack.c.l.b16 %v778
        %v1166 = vunpack.c.h.b16 %v778
        %v1167 = vunpack.c.l.b16 %v779
        %v1168 = vunpack.c.h.b16 %v779
        %v1169 = vunpack.c.l.b16 %v780
        %v1170 = vunpack.c.h.b16 %v780
        %v1171 = vunpack.c.l.b16 %v781
        %v1172 = vunpack.c.h.b16 %v781
        %v1173 = vunpack.c.l.b16 %v782
        %v1174 = vunpack.c.h.b16 %v782
        %v1175 = vunpack.c.l.b16 %v783
        %v1176 = vunpack.c.h.b16 %v783
        %v1177 = vunpack.c.l.b16 %v784
        %v1178 = vunpack.c.h.b16 %v784
        %v1179 = vunpack.c.l.b16 %v785
        %v1180 = vunpack.c.h.b16 %v785
        %v1181 = vunpack.c.l.b16 %v786
        %v1182 = vunpack.c.h.b16 %v786
        %v1183 = vunpack.c.l.b16 %v787
        %v1184 = vunpack.c.h.b16 %v787
        %v1185 = vunpack.c.l.b16 %v788
        %v1186 = vunpack.c.h.b16 %v788
        %v1187 = vunpack.c.l.b16 %v789
        %v1188 = vunpack.c.h.b16 %v789
        %v1189 = vunpack.c.l.b16 %v790
        %v1190 = vunpack.c.h.b16 %v790
        %v1191 = vunpack.c.l.b16 %v791
        %v1192 = vunpack.c.h.b16 %v791
        %v1193 = vunpack.c.l.b16 %v792
        %v1194 = vunpack.c.h.b16 %v792
        %v1195 = vunpack.c.l.b16 %v793
        %v1196 = vunpack.c.h.b16 %v793
        %v1197 = vunpack.c.l.b16 %v794
        %v1198 = vunpack.c.h.b16 %v794
        %v1199 = vunpack.c.l.b16 %v795
        %v1200 = vunpack.c.h.b16 %v795
        %v1201 = vunpack.c.l.b16 %v796
        %v1202 = vunpack.c.h.b16 %v796
        %v1203 = vunpack.c.l.b16 %v797
        %v1204 = vunpack.c.h.b16 %v797
        %v1205 = vunpack.c.l.b16 %v798
        %v1206 = vunpack.c.h.b16 %v798
        %v1207 = vunpack.c.l.b16 %v799
        %v1208 = vunpack.c.h.b16 %v799
        %v1209 = vunpack.c.l.b16 %v800
        %v1210 = vunpack.c.h.b16 %v800
        %v1211 = vunpack.c.l.b16 %v801
        %v1212 = vunpack.c.h.b16 %v801
        %v1213 = vunpack.c.l.b16 %v802
        %v1214 = vunpack.c.h.b16 %v802
        %v1215 = vpack.c.b16 %v963, %v959
        %v1216 = vpack.c.b16 %v964, %v960
        %v1217 = vpack.c.b16 %v965, %v961
        %v1218 = vpack.c.b16 %v966, %v962
        %v1219 = vpack.c.b16 %v971, %v967
        %v1220 = vpack.c.b16 %v972, %v968
        %v1221 = vpack.c.b16 %v973, %v969
        %v1222 = vpack.c.b16 %v974, %v970
        %v1223 = vpack.c.b16 %v979, %v975
        %v1224 = vpack.c.b16 %v980, %v976
        %v1225 = vpack.c.b16 %v981, %v977
        %v1226 = vpack.c.b16 %v982, %v978
        %v1227 = vpack.c.b16 %v987, %v983
        %v1228 = vpack.c.b16 %v988, %v984
        %v1229 = vpack.c.b16 %v989, %v985
        %v1230 = vpack.c.b16 %v990, %v986
        %v1231 = vpack.c.b16 %v995, %v991
        %v1232 = vpack.c.b16 %v996, %v992
        %v1233 = vpack.c.b16 %v997, %v993
        %v1234 = vpack.c.b16 %v998, %v994
        %v1235 = vpack.c.b16 %v1003, %v999
        %v1236 = vpack.c.b16 %v1004, %v1000
        %v1237 = vpack.c.b16 %v1005, %v1001
        %v1238 = vpack.c.b16 %v1006, %v1002
        %v1239 = vpack.c.b16 %v1011, %v1007
        %v1240 = vpack.c.b16 %v1012, %v1008
        %v1241 = vpack.c.b16 %v1013, %v1009
        %v1242 = vpack.c.b16 %v1014, %v1010
        %v1243 = vpack.c.b16 %v1019, %v1015
        %v1244 = vpack.c.b16 %v1020, %v1016
        %v1245 = vpack.c.b16 %v1021, %v1017
        %v1246 = vpack.c.b16 %v1022, %v1018
        %v1247 = vpack.c.b16 %v1027, %v1023
        %v1248 = vpack.c.b16 %v1028, %v1024
        %v1249 = vpack.c.b16 %v1029, %v1025
        %v1250 = vpack.c.b16 %v1030, %v1026
        %v1251 = vpack.c.b16 %v1035, %v1031
        %v1252 = vpack.c.b16 %v1036, %v1032
        %v1253 = vpack.c.b16 %v1037, %v1033
        %v1254 = vpack.c.b16 %v1038, %v1034
        %v1255 = vpack.c.b16 %v1043, %v1039
        %v1256 = vpack.c.b16 %v1044, %v1040
        %v1257 = vpack.c.b16 %v1045, %v1041
        %v1258 = vpack.c.b16 %v1046, %v1042
        %v1259 = vpack.c.b16 %v1051, %v1047
        %v1260 = vpack.c.b16 %v1052, %v1048
        %v1261 = vpack.c.b16 %v1053, %v1049
        %v1262 = vpack.c.b16 %v1054, %v1050
        %v1263 = vpack.c.b16 %v1059, %v1055
        %v1264 = vpack.c.b16 %v1060, %v1056
        %v1265 = vpack.c.b16 %v1061, %v1057
        %v1266 = vpack.c.b16 %v1062, %v1058
        %v1267 = vpack.c.b16 %v1067, %v1063
        %v1268 = vpack.c.b16 %v1068, %v1064
        %v1269 = vpack.c.b16 %v1069, %v1065
        %v1270 = vpack.c.b16 %v1070, %v1066
        %v1271 = vpack.c.b16 %v1075, %v1071
        %v1272 = vpack.c.b16 %v1076, %v1072
        %v1273 = vpack.c.b16 %v1077, %v1073
        %v1274 = vpack.c.b16 %v1078, %v1074
        %v1275 = vpack.c.b16 %v1083, %v1079
        %v1276 = vpack.c.b16 %v1084, %v1080
        %v1277 = vpack.c.b16 %v1085, %v1081
        %v1278 = vpack.c.b16 %v1086, %v1082
        %v1279 = vpack.c.b16 %v1091, %v1087
        %v1280 = vpack.c.b16 %v1092, %v1088
        %v1281 = vpack.c.b16 %v1093, %v1089
        %v1282 = vpack.c.b16 %v1094, %v1090
        %v1283 = vpack.c.b16 %v1099, %v1095
        %v1284 = vpack.c.b16 %v1100, %v1096
        %v1285 = vpack.c.b16 %v1101, %v1097
        %v1286 = vpack.c.b16 %v1102, %v1098
        %v1287 = vpack.c.b16 %v1107, %v1103
        %v1288 = vpack.c.b16 %v1108, %v1104
        %v1289 = vpack.c.b16 %v1109, %v1105
        %v1290 = vpack.c.b16 %v1110, %v1106
        %v1291 = vpack.c.b16 %v1115, %v1111
        %v1292 = vpack.c.b16 %v1116, %v1112
        %v1293 = vpack.c.b16 %v1117, %v1113
        %v1294 = vpack.c.b16 %v1118, %v1114
        %v1295 = vpack.c.b16 %v1123, %v1119
        %v1296 = vpack.c.b16 %v1124, %v1120
        %v1297 = vpack.c.b16 %v1125, %v1121
        %v1298 = vpack.c.b16 %v1126, %v1122
        %v1299 = vpack.c.b16 %v1131, %v1127
        %v1300 = vpack.c.b16 %v1132, %v1128
        %v1301 = vpack.c.b16 %v1133, %v1129
        %v1302 = vpack.c.b16 %v1134, %v1130
        %v1303 = vpack.c.b16 %v1139, %v1135
        %v1304 = vpack.c.b16 %v1140, %v1136
        %v1305 = vpack.c.b16 %v1141, %v1137
        %v1306 = vpack.c.b16 %v1142, %v1138
        %v1307 = vpack.c.b16 %v1147, %v1143
        %v1308 = vpack.c.b16 %v1148, %v1144
        %v1309 = vpack.c.b16 %v1149, %v1145
        %v1310 = vpack.c.b16 %v1150, %v1146
        %v1311 = vpack.c.b16 %v1155, %v1151
        %v1312 = vpack.c.b16 %v1156, %v1152
        %v1313 = vpack.c.b16 %v1157, %v1153
        %v1314 = vpack.c.b16 %v1158, %v1154
        %v1315 = vpack.c.b16 %v1163, %v1159
        %v1316 = vpack.c.b16 %v1164, %v1160
        %v1317 = vpack.c.b16 %v1165, %v1161
        %v1318 = vpack.c.b16 %v1166, %v1162
        %v1319 = vpack.c.b16 %v1171, %v1167
        %v1320 = vpack.c.b16 %v1172, %v1168
        %v1321 = vpack.c.b16 %v1173, %v1169
        %v1322 = vpack.c.b16 %v1174, %v1170
        %v1323 = vpack.c.b16 %v1179, %v1175
        %v1324 = vpack.c.b16 %v1180, %v1176
        %v1325 = vpack.c.b16 %v1181, %v1177
        %v1326 = vpack.c.b16 %v1182, %v1178
        %v1327 = vpack.c.b16 %v1187, %v1183
        %v1328 = vpack.c.b16 %v1188, %v1184
        %v1329 = vpack.c.b16 %v1189, %v1185
        %v1330 = vpack.c.b16 %v1190, %v1186
        %v1331 = vpack.c.b16 %v1195, %v1191
        %v1332 = vpack.c.b16 %v1196, %v1192
        %v1333 = vpack.c.b16 %v1197, %v1193
        %v1334 = vpack.c.b16 %v1198, %v1194
        %v1335 = vpack.c.b16 %v1203, %v1199
        %v1336 = vpack.c.b16 %v1204, %v1200
        %v1337 = vpack.c.b16 %v1205, %v1201
        %v1338 = vpack.c.b16 %v1206, %v1202
        %v1339 = vpack.c.b16 %v1211, %v1207
        %v1340 = vpack.c.b16 %v1212, %v1208
        %v1341 = vpack.c.b16 %v1213, %v1209
        %v1342 = vpack.c.b16 %v1214, %v1210
        %1471 = vmatpush.bf16.msra.mxu0 %v1243
        %1472 = vmatpush.bf16.msra.mxu0 %v1239
        %1473 = vmatpush.bf16.msra.mxu0 %v1235
        %1474 = vmatpush.bf16.msra.mxu0 %v1231
        %1475 = vmatpush.bf16.msra.mxu0 %v1227
        %1476 = vmatpush.bf16.msra.mxu0 %v1223
        %1477 = vmatpush.bf16.msra.mxu0 %v1219
        %1478 = vmatpush.bf16.msra.mxu0 %v1215
        %1479 = vmatmul.bf16.gmra.mxu0 %v823
        %v1480 = vpop.f32.mrf.mxu0
        %v1481 = vadd.f32 0.0, %v1480
        %v1482 = vpop.f32.mrf.mxu0
        %1483 = vdwg.mxu0
        %1484 = vmatpush.bf16.msra.mxu0 %v1275
        %1485 = vmatpush.bf16.msra.mxu0 %v1271
        %1486 = vmatpush.bf16.msra.mxu0 %v1267
        %1487 = vmatpush.bf16.msra.mxu0 %v1263
        %1488 = vmatpush.bf16.msra.mxu0 %v1259
        %1489 = vmatpush.bf16.msra.mxu0 %v1255
        %1490 = vmatpush.bf16.msra.mxu0 %v1251
        %1491 = vmatpush.bf16.msra.mxu0 %v1247
        %1492 = vmatmul.bf16.gmra.mxu0 %v824
        %v1493 = vpop.f32.mrf.mxu0
        %v1494 = vadd.f32 %v1481, %v1493
        %v1495 = vpop.f32.mrf.mxu0
        %1496 = vdwg.mxu0
        %1497 = vmatpush.bf16.msra.mxu0 %v1307
        %1498 = vmatpush.bf16.msra.mxu0 %v1303
        %1499 = vmatpush.bf16.msra.mxu0 %v1299
        %1500 = vmatpush.bf16.msra.mxu0 %v1295
        %1501 = vmatpush.bf16.msra.mxu0 %v1291
        %1502 = vmatpush.bf16.msra.mxu0 %v1287
        %1503 = vmatpush.bf16.msra.mxu0 %v1283
        %1504 = vmatpush.bf16.msra.mxu0 %v1279
        %1505 = vmatmul.bf16.gmra.mxu0 %v825
        %v1506 = vpop.f32.mrf.mxu0
        %v1507 = vadd.f32 %v1494, %v1506
        %v1508 = vpop.f32.mrf.mxu0
        %1509 = vdwg.mxu0
        %1510 = vmatpush.bf16.msra.mxu0 %v1339
        %1511 = vmatpush.bf16.msra.mxu0 %v1335
        %1512 = vmatpush.bf16.msra.mxu0 %v1331
        %1513 = vmatpush.bf16.msra.mxu0 %v1327
        %1514 = vmatpush.bf16.msra.mxu0 %v1323
        %1515 = vmatpush.bf16.msra.mxu0 %v1319
        %1516 = vmatpush.bf16.msra.mxu0 %v1315
        %1517 = vmatpush.bf16.msra.mxu0 %v1311
        %1518 = vmatmul.bf16.gmra.mxu0 %v826
        %v1519 = vpop.f32.mrf.mxu0
        %v1520 = vadd.f32 %v1507, %v1519
        %v1521 = vpop.f32.mrf.mxu0
        %1522 = vdwg.mxu0
        %1523 = vmatpush.bf16.msra.mxu0 %v1244
        %1524 = vmatpush.bf16.msra.mxu0 %v1240
        %1525 = vmatpush.bf16.msra.mxu0 %v1236
        %1526 = vmatpush.bf16.msra.mxu0 %v1232
        %1527 = vmatpush.bf16.msra.mxu0 %v1228
        %1528 = vmatpush.bf16.msra.mxu0 %v1224
        %1529 = vmatpush.bf16.msra.mxu0 %v1220
        %1530 = vmatpush.bf16.msra.mxu0 %v1216
        %1531 = vmatmul.bf16.gmra.mxu0 %v823
        %v1532 = vpop.f32.mrf.mxu0
        %v1533 = vadd.f32 0.0, %v1532
        %v1534 = vpop.f32.mrf.mxu0
        %1535 = vdwg.mxu0
        %1536 = vmatpush.bf16.msra.mxu0 %v1276
        %1537 = vmatpush.bf16.msra.mxu0 %v1272
        %1538 = vmatpush.bf16.msra.mxu0 %v1268
        %1539 = vmatpush.bf16.msra.mxu0 %v1264
        %1540 = vmatpush.bf16.msra.mxu0 %v1260
        %1541 = vmatpush.bf16.msra.mxu0 %v1256
        %1542 = vmatpush.bf16.msra.mxu0 %v1252
        %1543 = vmatpush.bf16.msra.mxu0 %v1248
        %1544 = vmatmul.bf16.gmra.mxu0 %v824
        %v1545 = vpop.f32.mrf.mxu0
        %v1546 = vadd.f32 %v1533, %v1545
        %v1547 = vpop.f32.mrf.mxu0
        %1548 = vdwg.mxu0
        %1549 = vmatpush.bf16.msra.mxu0 %v1308
        %1550 = vmatpush.bf16.msra.mxu0 %v1304
        %1551 = vmatpush.bf16.msra.mxu0 %v1300
        %1552 = vmatpush.bf16.msra.mxu0 %v1296
        %1553 = vmatpush.bf16.msra.mxu0 %v1292
        %1554 = vmatpush.bf16.msra.mxu0 %v1288
        %1555 = vmatpush.bf16.msra.mxu0 %v1284
        %1556 = vmatpush.bf16.msra.mxu0 %v1280
        %1557 = vmatmul.bf16.gmra.mxu0 %v825
        %v1558 = vpop.f32.mrf.mxu0
        %v1559 = vadd.f32 %v1546, %v1558
        %v1560 = vpop.f32.mrf.mxu0
        %1561 = vdwg.mxu0
        %1562 = vmatpush.bf16.msra.mxu0 %v1340
        %1563 = vmatpush.bf16.msra.mxu0 %v1336
        %1564 = vmatpush.bf16.msra.mxu0 %v1332
        %1565 = vmatpush.bf16.msra.mxu0 %v1328
        %1566 = vmatpush.bf16.msra.mxu0 %v1324
        %1567 = vmatpush.bf16.msra.mxu0 %v1320
        %1568 = vmatpush.bf16.msra.mxu0 %v1316
        %1569 = vmatpush.bf16.msra.mxu0 %v1312
        %1570 = vmatmul.bf16.gmra.mxu0 %v826
        %v1571 = vpop.f32.mrf.mxu0
        %v1572 = vadd.f32 %v1559, %v1571
        %v1573 = vpop.f32.mrf.mxu0
        %1574 = vdwg.mxu0
        %1575 = vmatpush.bf16.msra.mxu0 %v1245
        %1576 = vmatpush.bf16.msra.mxu0 %v1241
        %1577 = vmatpush.bf16.msra.mxu0 %v1237
        %1578 = vmatpush.bf16.msra.mxu0 %v1233
        %1579 = vmatpush.bf16.msra.mxu0 %v1229
        %1580 = vmatpush.bf16.msra.mxu0 %v1225
        %1581 = vmatpush.bf16.msra.mxu0 %v1221
        %1582 = vmatpush.bf16.msra.mxu0 %v1217
        %1583 = vmatmul.bf16.gmra.mxu0 %v823
        %v1584 = vpop.f32.mrf.mxu0
        %v1585 = vadd.f32 0.0, %v1584
        %v1586 = vpop.f32.mrf.mxu0
        %1587 = vdwg.mxu0
        %1588 = vmatpush.bf16.msra.mxu0 %v1277
        %1589 = vmatpush.bf16.msra.mxu0 %v1273
        %1590 = vmatpush.bf16.msra.mxu0 %v1269
        %1591 = vmatpush.bf16.msra.mxu0 %v1265
        %1592 = vmatpush.bf16.msra.mxu0 %v1261
        %1593 = vmatpush.bf16.msra.mxu0 %v1257
        %1594 = vmatpush.bf16.msra.mxu0 %v1253
        %1595 = vmatpush.bf16.msra.mxu0 %v1249
        %1596 = vmatmul.bf16.gmra.mxu0 %v824
        %v1597 = vpop.f32.mrf.mxu0
        %v1598 = vadd.f32 %v1585, %v1597
        %v1599 = vpop.f32.mrf.mxu0
        %1600 = vdwg.mxu0
        %1601 = vmatpush.bf16.msra.mxu0 %v1309
        %1602 = vmatpush.bf16.msra.mxu0 %v1305
        %1603 = vmatpush.bf16.msra.mxu0 %v1301
        %1604 = vmatpush.bf16.msra.mxu0 %v1297
        %1605 = vmatpush.bf16.msra.mxu0 %v1293
        %1606 = vmatpush.bf16.msra.mxu0 %v1289
        %1607 = vmatpush.bf16.msra.mxu0 %v1285
        %1608 = vmatpush.bf16.msra.mxu0 %v1281
        %1609 = vmatmul.bf16.gmra.mxu0 %v825
        %v1610 = vpop.f32.mrf.mxu0
        %v1611 = vadd.f32 %v1598, %v1610
        %v1612 = vpop.f32.mrf.mxu0
        %1613 = vdwg.mxu0
        %1614 = vmatpush.bf16.msra.mxu0 %v1341
        %1615 = vmatpush.bf16.msra.mxu0 %v1337
        %1616 = vmatpush.bf16.msra.mxu0 %v1333
        %1617 = vmatpush.bf16.msra.mxu0 %v1329
        %1618 = vmatpush.bf16.msra.mxu0 %v1325
        %1619 = vmatpush.bf16.msra.mxu0 %v1321
        %1620 = vmatpush.bf16.msra.mxu0 %v1317
        %1621 = vmatpush.bf16.msra.mxu0 %v1313
        %1622 = vmatmul.bf16.gmra.mxu0 %v826
        %v1623 = vpop.f32.mrf.mxu0
        %v1624 = vadd.f32 %v1611, %v1623
        %v1625 = vpop.f32.mrf.mxu0
        %1626 = vdwg.mxu0
        %1627 = vmatpush.bf16.msra.mxu0 %v1246
        %1628 = vmatpush.bf16.msra.mxu0 %v1242
        %1629 = vmatpush.bf16.msra.mxu0 %v1238
        %1630 = vmatpush.bf16.msra.mxu0 %v1234
        %1631 = vmatpush.bf16.msra.mxu0 %v1230
        %1632 = vmatpush.bf16.msra.mxu0 %v1226
        %1633 = vmatpush.bf16.msra.mxu0 %v1222
        %1634 = vmatpush.bf16.msra.mxu0 %v1218
        %1635 = vmatmul.bf16.gmra.mxu0 %v823
        %v1636 = vpop.f32.mrf.mxu0
        %v1637 = vadd.f32 0.0, %v1636
        %v1638 = vpop.f32.mrf.mxu0
        %1639 = vdwg.mxu0
        %1640 = vmatpush.bf16.msra.mxu0 %v1278
        %1641 = vmatpush.bf16.msra.mxu0 %v1274
        %1642 = vmatpush.bf16.msra.mxu0 %v1270
        %1643 = vmatpush.bf16.msra.mxu0 %v1266
        %1644 = vmatpush.bf16.msra.mxu0 %v1262
        %1645 = vmatpush.bf16.msra.mxu0 %v1258
        %1646 = vmatpush.bf16.msra.mxu0 %v1254
        %1647 = vmatpush.bf16.msra.mxu0 %v1250
        %1648 = vmatmul.bf16.gmra.mxu0 %v824
        %v1649 = vpop.f32.mrf.mxu0
        %v1650 = vadd.f32 %v1637, %v1649
        %v1651 = vpop.f32.mrf.mxu0
        %1652 = vdwg.mxu0
        %1653 = vmatpush.bf16.msra.mxu0 %v1310
        %1654 = vmatpush.bf16.msra.mxu0 %v1306
        %1655 = vmatpush.bf16.msra.mxu0 %v1302
        %1656 = vmatpush.bf16.msra.mxu0 %v1298
        %1657 = vmatpush.bf16.msra.mxu0 %v1294
        %1658 = vmatpush.bf16.msra.mxu0 %v1290
        %1659 = vmatpush.bf16.msra.mxu0 %v1286
        %1660 = vmatpush.bf16.msra.mxu0 %v1282
        %1661 = vmatmul.bf16.gmra.mxu0 %v825
        %v1662 = vpop.f32.mrf.mxu0
        %v1663 = vadd.f32 %v1650, %v1662
        %v1664 = vpop.f32.mrf.mxu0
        %1665 = vdwg.mxu0
        %1666 = vmatpush.bf16.msra.mxu0 %v1342
        %1667 = vmatpush.bf16.msra.mxu0 %v1338
        %1668 = vmatpush.bf16.msra.mxu0 %v1334
        %1669 = vmatpush.bf16.msra.mxu0 %v1330
        %1670 = vmatpush.bf16.msra.mxu0 %v1326
        %1671 = vmatpush.bf16.msra.mxu0 %v1322
        %1672 = vmatpush.bf16.msra.mxu0 %v1318
        %1673 = vmatpush.bf16.msra.mxu0 %v1314
        %1674 = vmatmul.bf16.gmra.mxu0 %v826
        %v1675 = vpop.f32.mrf.mxu0
        %v1676 = vadd.f32 %v1663, %v1675
        %v1677 = vpop.f32.mrf.mxu0
        %1678 = vdwg.mxu0
        %v1683 = vrot.slane %v1572, 6
        %v1684 = vrot.slane %v1624, 4
        %v1685 = vrot.slane %v1676, 2
        %v1686 = vsel %vm642, %v1520, %v1683
        %v1687 = vsel %vm644, %v1684, %v1685
        %v1688 = vsel %vm646, %v1686, %v1687
        %v1690 = vadd.f32 %v666, %v1688
        %1691 = vst [vmem:[#allocation2] sm:$0xff] %v1690
        %v1692 = vpack.c.bf16 %v545, %v541
        %v1693 = vpack.c.bf16 %v546, %v542
        %v1694 = vpack.c.bf16 %v547, %v543
        %v1695 = vpack.c.bf16 %v548, %v544
        %v1696 = vpack.c.bf16 %v553, %v549
        %v1697 = vpack.c.bf16 %v554, %v550
        %v1698 = vpack.c.bf16 %v555, %v551
        %v1699 = vpack.c.bf16 %v556, %v552
        %v1700 = vld [vmem:[#allocation3] sm:$0xff]
        %v1701 = vld [vmem:[#allocation3 + $0x8] sm:$0xff]
        %v1702 = vld [vmem:[#allocation3 + $0x10] sm:$0xff]
        %v1703 = vld [vmem:[#allocation3 + $0x18] sm:$0xff]
        %v1704 = vld [vmem:[#allocation3 + $0x20] sm:$0xff]
        %v1705 = vld [vmem:[#allocation3 + $0x28] sm:$0xff]
        %v1706 = vld [vmem:[#allocation3 + $0x30] sm:$0xff]
        %v1707 = vld [vmem:[#allocation3 + $0x38] sm:$0xff]
        %v1708 = vld [vmem:[%s472] sm:$0xff]
        %v1709 = vld [vmem:[%s472 + $0x8] sm:$0xff]
        %v1710 = vld [vmem:[%s472 + $0x10] sm:$0xff]
        %v1711 = vld [vmem:[%s472 + $0x18] sm:$0xff]
        %v1712 = vld [vmem:[%s472 + $0x20] sm:$0xff]
        %v1713 = vld [vmem:[%s472 + $0x28] sm:$0xff]
        %v1714 = vld [vmem:[%s472 + $0x30] sm:$0xff]
        %v1715 = vld [vmem:[%s472 + $0x38] sm:$0xff]
        %v1716 = vld [vmem:[%s472 + $0x40] sm:$0xff]
        %v1717 = vld [vmem:[%s472 + $0x48] sm:$0xff]
        %v1718 = vld [vmem:[%s472 + $0x50] sm:$0xff]
        %v1719 = vld [vmem:[%s472 + $0x58] sm:$0xff]
        %v1720 = vld [vmem:[%s472 + $0x60] sm:$0xff]
        %v1721 = vld [vmem:[%s472 + $0x68] sm:$0xff]
        %v1722 = vld [vmem:[%s472 + $0x70] sm:$0xff]
        %v1723 = vld [vmem:[%s472 + $0x78] sm:$0xff]
        %v1724 = vld [vmem:[%s472 + $0x80] sm:$0xff]
        %v1725 = vld [vmem:[%s472 + $0x88] sm:$0xff]
        %v1726 = vld [vmem:[%s472 + $0x90] sm:$0xff]
        %v1727 = vld [vmem:[%s472 + $0x98] sm:$0xff]
        %v1728 = vld [vmem:[%s472 + $0xa0] sm:$0xff]
        %v1729 = vld [vmem:[%s472 + $0xa8] sm:$0xff]
        %v1730 = vld [vmem:[%s472 + $0xb0] sm:$0xff]
        %v1731 = vld [vmem:[%s472 + $0xb8] sm:$0xff]
        %v1732 = vld [vmem:[%s472 + $0xc0] sm:$0xff]
        %v1733 = vld [vmem:[%s472 + $0xc8] sm:$0xff]
        %v1734 = vld [vmem:[%s472 + $0xd0] sm:$0xff]
        %v1735 = vld [vmem:[%s472 + $0xd8] sm:$0xff]
        %v1736 = vld [vmem:[%s472 + $0xe0] sm:$0xff]
        %v1737 = vld [vmem:[%s472 + $0xe8] sm:$0xff]
        %v1738 = vld [vmem:[%s472 + $0xf0] sm:$0xff]
        %v1739 = vld [vmem:[%s472 + $0xf8] sm:$0xff]
        %v1740 = vld [vmem:[%s472 + $0x100] sm:$0xff]
        %v1741 = vld [vmem:[%s472 + $0x108] sm:$0xff]
        %v1742 = vld [vmem:[%s472 + $0x110] sm:$0xff]
        %v1743 = vld [vmem:[%s472 + $0x118] sm:$0xff]
        %v1744 = vld [vmem:[%s472 + $0x120] sm:$0xff]
        %v1745 = vld [vmem:[%s472 + $0x128] sm:$0xff]
        %v1746 = vld [vmem:[%s472 + $0x130] sm:$0xff]
        %v1747 = vld [vmem:[%s472 + $0x138] sm:$0xff]
        %v1748 = vld [vmem:[%s472 + $0x140] sm:$0xff]
        %v1749 = vld [vmem:[%s472 + $0x148] sm:$0xff]
        %v1750 = vld [vmem:[%s472 + $0x150] sm:$0xff]
        %v1751 = vld [vmem:[%s472 + $0x158] sm:$0xff]
        %v1752 = vld [vmem:[%s472 + $0x160] sm:$0xff]
        %v1753 = vld [vmem:[%s472 + $0x168] sm:$0xff]
        %v1754 = vld [vmem:[%s472 + $0x170] sm:$0xff]
        %v1755 = vld [vmem:[%s472 + $0x178] sm:$0xff]
        %v1756 = vld [vmem:[%s472 + $0x180] sm:$0xff]
        %v1757 = vld [vmem:[%s472 + $0x188] sm:$0xff]
        %v1758 = vld [vmem:[%s472 + $0x190] sm:$0xff]
        %v1759 = vld [vmem:[%s472 + $0x198] sm:$0xff]
        %v1760 = vld [vmem:[%s472 + $0x1a0] sm:$0xff]
        %v1761 = vld [vmem:[%s472 + $0x1a8] sm:$0xff]
        %v1762 = vld [vmem:[%s472 + $0x1b0] sm:$0xff]
        %v1763 = vld [vmem:[%s472 + $0x1b8] sm:$0xff]
        %v1764 = vld [vmem:[%s472 + $0x1c0] sm:$0xff]
        %v1765 = vld [vmem:[%s472 + $0x1c8] sm:$0xff]
        %v1766 = vld [vmem:[%s472 + $0x1d0] sm:$0xff]
        %v1767 = vld [vmem:[%s472 + $0x1d8] sm:$0xff]
        %v1768 = vld [vmem:[%s472 + $0x1e0] sm:$0xff]
        %v1769 = vld [vmem:[%s472 + $0x1e8] sm:$0xff]
        %v1770 = vld [vmem:[%s472 + $0x1f0] sm:$0xff]
        %v1771 = vld [vmem:[%s472 + $0x1f8] sm:$0xff]
        %v1836 = vunpack.c.l.b16 %v1708
        %v1837 = vunpack.c.h.b16 %v1708
        %v1838 = vunpack.c.l.b16 %v1709
        %v1839 = vunpack.c.h.b16 %v1709
        %v1840 = vunpack.c.l.b16 %v1710
        %v1841 = vunpack.c.h.b16 %v1710
        %v1842 = vunpack.c.l.b16 %v1711
        %v1843 = vunpack.c.h.b16 %v1711
        %v1844 = vunpack.c.l.b16 %v1712
        %v1845 = vunpack.c.h.b16 %v1712
        %v1846 = vunpack.c.l.b16 %v1713
        %v1847 = vunpack.c.h.b16 %v1713
        %v1848 = vunpack.c.l.b16 %v1714
        %v1849 = vunpack.c.h.b16 %v1714
        %v1850 = vunpack.c.l.b16 %v1715
        %v1851 = vunpack.c.h.b16 %v1715
        %v1852 = vunpack.c.l.b16 %v1716
        %v1853 = vunpack.c.h.b16 %v1716
        %v1854 = vunpack.c.l.b16 %v1717
        %v1855 = vunpack.c.h.b16 %v1717
        %v1856 = vunpack.c.l.b16 %v1718
        %v1857 = vunpack.c.h.b16 %v1718
        %v1858 = vunpack.c.l.b16 %v1719
        %v1859 = vunpack.c.h.b16 %v1719
        %v1860 = vunpack.c.l.b16 %v1720
        %v1861 = vunpack.c.h.b16 %v1720
        %v1862 = vunpack.c.l.b16 %v1721
        %v1863 = vunpack.c.h.b16 %v1721
        %v1864 = vunpack.c.l.b16 %v1722
        %v1865 = vunpack.c.h.b16 %v1722
        %v1866 = vunpack.c.l.b16 %v1723
        %v1867 = vunpack.c.h.b16 %v1723
        %v1868 = vunpack.c.l.b16 %v1724
        %v1869 = vunpack.c.h.b16 %v1724
        %v1870 = vunpack.c.l.b16 %v1725
        %v1871 = vunpack.c.h.b16 %v1725
        %v1872 = vunpack.c.l.b16 %v1726
        %v1873 = vunpack.c.h.b16 %v1726
        %v1874 = vunpack.c.l.b16 %v1727
        %v1875 = vunpack.c.h.b16 %v1727
        %v1876 = vunpack.c.l.b16 %v1728
        %v1877 = vunpack.c.h.b16 %v1728
        %v1878 = vunpack.c.l.b16 %v1729
        %v1879 = vunpack.c.h.b16 %v1729
        %v1880 = vunpack.c.l.b16 %v1730
        %v1881 = vunpack.c.h.b16 %v1730
        %v1882 = vunpack.c.l.b16 %v1731
        %v1883 = vunpack.c.h.b16 %v1731
        %v1884 = vunpack.c.l.b16 %v1732
        %v1885 = vunpack.c.h.b16 %v1732
        %v1886 = vunpack.c.l.b16 %v1733
        %v1887 = vunpack.c.h.b16 %v1733
        %v1888 = vunpack.c.l.b16 %v1734
        %v1889 = vunpack.c.h.b16 %v1734
        %v1890 = vunpack.c.l.b16 %v1735
        %v1891 = vunpack.c.h.b16 %v1735
        %v1892 = vunpack.c.l.b16 %v1736
        %v1893 = vunpack.c.h.b16 %v1736
        %v1894 = vunpack.c.l.b16 %v1737
        %v1895 = vunpack.c.h.b16 %v1737
        %v1896 = vunpack.c.l.b16 %v1738
        %v1897 = vunpack.c.h.b16 %v1738
        %v1898 = vunpack.c.l.b16 %v1739
        %v1899 = vunpack.c.h.b16 %v1739
        %v1900 = vunpack.c.l.b16 %v1740
        %v1901 = vunpack.c.h.b16 %v1740
        %v1902 = vunpack.c.l.b16 %v1741
        %v1903 = vunpack.c.h.b16 %v1741
        %v1904 = vunpack.c.l.b16 %v1742
        %v1905 = vunpack.c.h.b16 %v1742
        %v1906 = vunpack.c.l.b16 %v1743
        %v1907 = vunpack.c.h.b16 %v1743
        %v1908 = vunpack.c.l.b16 %v1744
        %v1909 = vunpack.c.h.b16 %v1744
        %v1910 = vunpack.c.l.b16 %v1745
        %v1911 = vunpack.c.h.b16 %v1745
        %v1912 = vunpack.c.l.b16 %v1746
        %v1913 = vunpack.c.h.b16 %v1746
        %v1914 = vunpack.c.l.b16 %v1747
        %v1915 = vunpack.c.h.b16 %v1747
        %v1916 = vunpack.c.l.b16 %v1748
        %v1917 = vunpack.c.h.b16 %v1748
        %v1918 = vunpack.c.l.b16 %v1749
        %v1919 = vunpack.c.h.b16 %v1749
        %v1920 = vunpack.c.l.b16 %v1750
        %v1921 = vunpack.c.h.b16 %v1750
        %v1922 = vunpack.c.l.b16 %v1751
        %v1923 = vunpack.c.h.b16 %v1751
        %v1924 = vunpack.c.l.b16 %v1752
        %v1925 = vunpack.c.h.b16 %v1752
        %v1926 = vunpack.c.l.b16 %v1753
        %v1927 = vunpack.c.h.b16 %v1753
        %v1928 = vunpack.c.l.b16 %v1754
        %v1929 = vunpack.c.h.b16 %v1754
        %v1930 = vunpack.c.l.b16 %v1755
        %v1931 = vunpack.c.h.b16 %v1755
        %v1932 = vunpack.c.l.b16 %v1756
        %v1933 = vunpack.c.h.b16 %v1756
        %v1934 = vunpack.c.l.b16 %v1757
        %v1935 = vunpack.c.h.b16 %v1757
        %v1936 = vunpack.c.l.b16 %v1758
        %v1937 = vunpack.c.h.b16 %v1758
        %v1938 = vunpack.c.l.b16 %v1759
        %v1939 = vunpack.c.h.b16 %v1759
        %v1940 = vunpack.c.l.b16 %v1760
        %v1941 = vunpack.c.h.b16 %v1760
        %v1942 = vunpack.c.l.b16 %v1761
        %v1943 = vunpack.c.h.b16 %v1761
        %v1944 = vunpack.c.l.b16 %v1762
        %v1945 = vunpack.c.h.b16 %v1762
        %v1946 = vunpack.c.l.b16 %v1763
        %v1947 = vunpack.c.h.b16 %v1763
        %v1948 = vunpack.c.l.b16 %v1764
        %v1949 = vunpack.c.h.b16 %v1764
        %v1950 = vunpack.c.l.b16 %v1765
        %v1951 = vunpack.c.h.b16 %v1765
        %v1952 = vunpack.c.l.b16 %v1766
        %v1953 = vunpack.c.h.b16 %v1766
        %v1954 = vunpack.c.l.b16 %v1767
        %v1955 = vunpack.c.h.b16 %v1767
        %v1956 = vunpack.c.l.b16 %v1768
        %v1957 = vunpack.c.h.b16 %v1768
        %v1958 = vunpack.c.l.b16 %v1769
        %v1959 = vunpack.c.h.b16 %v1769
        %v1960 = vunpack.c.l.b16 %v1770
        %v1961 = vunpack.c.h.b16 %v1770
        %v1962 = vunpack.c.l.b16 %v1771
        %v1963 = vunpack.c.h.b16 %v1771
        %v1964 = vpack.c.b16 %v1838, %v1836
        %v1965 = vpack.c.b16 %v1839, %v1837
        %v1966 = vpack.c.b16 %v1842, %v1840
        %v1967 = vpack.c.b16 %v1843, %v1841
        %v1968 = vpack.c.b16 %v1846, %v1844
        %v1969 = vpack.c.b16 %v1847, %v1845
        %v1970 = vpack.c.b16 %v1850, %v1848
        %v1971 = vpack.c.b16 %v1851, %v1849
        %v1972 = vpack.c.b16 %v1854, %v1852
        %v1973 = vpack.c.b16 %v1855, %v1853
        %v1974 = vpack.c.b16 %v1858, %v1856
        %v1975 = vpack.c.b16 %v1859, %v1857
        %v1976 = vpack.c.b16 %v1862, %v1860
        %v1977 = vpack.c.b16 %v1863, %v1861
        %v1978 = vpack.c.b16 %v1866, %v1864
        %v1979 = vpack.c.b16 %v1867, %v1865
        %v1980 = vpack.c.b16 %v1870, %v1868
        %v1981 = vpack.c.b16 %v1871, %v1869
        %v1982 = vpack.c.b16 %v1874, %v1872
        %v1983 = vpack.c.b16 %v1875, %v1873
        %v1984 = vpack.c.b16 %v1878, %v1876
        %v1985 = vpack.c.b16 %v1879, %v1877
        %v1986 = vpack.c.b16 %v1882, %v1880
        %v1987 = vpack.c.b16 %v1883, %v1881
        %v1988 = vpack.c.b16 %v1886, %v1884
        %v1989 = vpack.c.b16 %v1887, %v1885
        %v1990 = vpack.c.b16 %v1890, %v1888
        %v1991 = vpack.c.b16 %v1891, %v1889
        %v1992 = vpack.c.b16 %v1894, %v1892
        %v1993 = vpack.c.b16 %v1895, %v1893
        %v1994 = vpack.c.b16 %v1898, %v1896
        %v1995 = vpack.c.b16 %v1899, %v1897
        %v1996 = vpack.c.b16 %v1902, %v1900
        %v1997 = vpack.c.b16 %v1903, %v1901
        %v1998 = vpack.c.b16 %v1906, %v1904
        %v1999 = vpack.c.b16 %v1907, %v1905
        %v2000 = vpack.c.b16 %v1910, %v1908
        %v2001 = vpack.c.b16 %v1911, %v1909
        %v2002 = vpack.c.b16 %v1914, %v1912
        %v2003 = vpack.c.b16 %v1915, %v1913
        %v2004 = vpack.c.b16 %v1918, %v1916
        %v2005 = vpack.c.b16 %v1919, %v1917
        %v2006 = vpack.c.b16 %v1922, %v1920
        %v2007 = vpack.c.b16 %v1923, %v1921
        %v2008 = vpack.c.b16 %v1926, %v1924
        %v2009 = vpack.c.b16 %v1927, %v1925
        %v2010 = vpack.c.b16 %v1930, %v1928
        %v2011 = vpack.c.b16 %v1931, %v1929
        %v2012 = vpack.c.b16 %v1934, %v1932
        %v2013 = vpack.c.b16 %v1935, %v1933
        %v2014 = vpack.c.b16 %v1938, %v1936
        %v2015 = vpack.c.b16 %v1939, %v1937
        %v2016 = vpack.c.b16 %v1942, %v1940
        %v2017 = vpack.c.b16 %v1943, %v1941
        %v2018 = vpack.c.b16 %v1946, %v1944
        %v2019 = vpack.c.b16 %v1947, %v1945
        %v2020 = vpack.c.b16 %v1950, %v1948
        %v2021 = vpack.c.b16 %v1951, %v1949
        %v2022 = vpack.c.b16 %v1954, %v1952
        %v2023 = vpack.c.b16 %v1955, %v1953
        %v2024 = vpack.c.b16 %v1958, %v1956
        %v2025 = vpack.c.b16 %v1959, %v1957
        %v2026 = vpack.c.b16 %v1962, %v1960
        %v2027 = vpack.c.b16 %v1963, %v1961
        %2092 = vmatpush.bf16.msra.mxu0 %v1978
        %2093 = vmatpush.bf16.msra.mxu0 %v1976
        %2094 = vmatpush.bf16.msra.mxu0 %v1974
        %2095 = vmatpush.bf16.msra.mxu0 %v1972
        %2096 = vmatpush.bf16.msra.mxu0 %v1970
        %2097 = vmatpush.bf16.msra.mxu0 %v1968
        %2098 = vmatpush.bf16.msra.mxu0 %v1966
        %2099 = vmatpush.bf16.msra.mxu0 %v1964
        %2100 = vmatmul.bf16.gmra.mxu0 %v1692
        %v2101 = vpop.f32.mrf.mxu0
        %v2102 = vadd.f32 0.0, %v2101
        %v2103 = vpop.f32.mrf.mxu0
        %v2104 = vadd.f32 0.0, %v2103
        %2105 = vmatmul.bf16.gmra.mxu0 %v1696
        %v2106 = vpop.f32.mrf.mxu0
        %v2107 = vadd.f32 0.0, %v2106
        %v2108 = vpop.f32.mrf.mxu0
        %v2109 = vadd.f32 0.0, %v2108
        %2110 = vdwg.mxu0
        %2111 = vmatpush.bf16.msra.mxu0 %v1994
        %2112 = vmatpush.bf16.msra.mxu0 %v1992
        %2113 = vmatpush.bf16.msra.mxu0 %v1990
        %2114 = vmatpush.bf16.msra.mxu0 %v1988
        %2115 = vmatpush.bf16.msra.mxu0 %v1986
        %2116 = vmatpush.bf16.msra.mxu0 %v1984
        %2117 = vmatpush.bf16.msra.mxu0 %v1982
        %2118 = vmatpush.bf16.msra.mxu0 %v1980
        %2119 = vmatmul.bf16.gmra.mxu0 %v1693
        %v2120 = vpop.f32.mrf.mxu0
        %v2121 = vadd.f32 %v2102, %v2120
        %v2122 = vpop.f32.mrf.mxu0
        %v2123 = vadd.f32 %v2104, %v2122
        %2124 = vmatmul.bf16.gmra.mxu0 %v1697
        %v2125 = vpop.f32.mrf.mxu0
        %v2126 = vadd.f32 %v2107, %v2125
        %v2127 = vpop.f32.mrf.mxu0
        %v2128 = vadd.f32 %v2109, %v2127
        %2129 = vdwg.mxu0
        %2130 = vmatpush.bf16.msra.mxu0 %v2010
        %2131 = vmatpush.bf16.msra.mxu0 %v2008
        %2132 = vmatpush.bf16.msra.mxu0 %v2006
        %2133 = vmatpush.bf16.msra.mxu0 %v2004
        %2134 = vmatpush.bf16.msra.mxu0 %v2002
        %2135 = vmatpush.bf16.msra.mxu0 %v2000
        %2136 = vmatpush.bf16.msra.mxu0 %v1998
        %2137 = vmatpush.bf16.msra.mxu0 %v1996
        %2138 = vmatmul.bf16.gmra.mxu0 %v1694
        %v2139 = vpop.f32.mrf.mxu0
        %v2140 = vadd.f32 %v2121, %v2139
        %v2141 = vpop.f32.mrf.mxu0
        %v2142 = vadd.f32 %v2123, %v2141
        %2143 = vmatmul.bf16.gmra.mxu0 %v1698
        %v2144 = vpop.f32.mrf.mxu0
        %v2145 = vadd.f32 %v2126, %v2144
        %v2146 = vpop.f32.mrf.mxu0
        %v2147 = vadd.f32 %v2128, %v2146
        %2148 = vdwg.mxu0
        %2149 = vmatpush.bf16.msra.mxu0 %v2026
        %2150 = vmatpush.bf16.msra.mxu0 %v2024
        %2151 = vmatpush.bf16.msra.mxu0 %v2022
        %2152 = vmatpush.bf16.msra.mxu0 %v2020
        %2153 = vmatpush.bf16.msra.mxu0 %v2018
        %2154 = vmatpush.bf16.msra.mxu0 %v2016
        %2155 = vmatpush.bf16.msra.mxu0 %v2014
        %2156 = vmatpush.bf16.msra.mxu0 %v2012
        %2157 = vmatmul.bf16.gmra.mxu0 %v1695
        %v2158 = vpop.f32.mrf.mxu0
        %v2159 = vadd.f32 %v2140, %v2158
        %v2160 = vpop.f32.mrf.mxu0
        %v2161 = vadd.f32 %v2142, %v2160
        %2162 = vmatmul.bf16.gmra.mxu0 %v1699
        %v2163 = vpop.f32.mrf.mxu0
        %v2164 = vadd.f32 %v2145, %v2163
        %v2165 = vpop.f32.mrf.mxu0
        %v2166 = vadd.f32 %v2147, %v2165
        %2167 = vdwg.mxu0
        %2168 = vmatpush.bf16.msra.mxu0 %v1979
        %2169 = vmatpush.bf16.msra.mxu0 %v1977
        %2170 = vmatpush.bf16.msra.mxu0 %v1975
        %2171 = vmatpush.bf16.msra.mxu0 %v1973
        %2172 = vmatpush.bf16.msra.mxu0 %v1971
        %2173 = vmatpush.bf16.msra.mxu0 %v1969
        %2174 = vmatpush.bf16.msra.mxu0 %v1967
        %2175 = vmatpush.bf16.msra.mxu0 %v1965
        %2176 = vmatmul.bf16.gmra.mxu0 %v1692
        %v2177 = vpop.f32.mrf.mxu0
        %v2178 = vadd.f32 0.0, %v2177
        %v2179 = vpop.f32.mrf.mxu0
        %v2180 = vadd.f32 0.0, %v2179
        %2181 = vmatmul.bf16.gmra.mxu0 %v1696
        %v2182 = vpop.f32.mrf.mxu0
        %v2183 = vadd.f32 0.0, %v2182
        %v2184 = vpop.f32.mrf.mxu0
        %v2185 = vadd.f32 0.0, %v2184
        %2186 = vdwg.mxu0
        %2187 = vmatpush.bf16.msra.mxu0 %v1995
        %2188 = vmatpush.bf16.msra.mxu0 %v1993
        %2189 = vmatpush.bf16.msra.mxu0 %v1991
        %2190 = vmatpush.bf16.msra.mxu0 %v1989
        %2191 = vmatpush.bf16.msra.mxu0 %v1987
        %2192 = vmatpush.bf16.msra.mxu0 %v1985
        %2193 = vmatpush.bf16.msra.mxu0 %v1983
        %2194 = vmatpush.bf16.msra.mxu0 %v1981
        %2195 = vmatmul.bf16.gmra.mxu0 %v1693
        %v2196 = vpop.f32.mrf.mxu0
        %v2197 = vadd.f32 %v2178, %v2196
        %v2198 = vpop.f32.mrf.mxu0
        %v2199 = vadd.f32 %v2180, %v2198
        %2200 = vmatmul.bf16.gmra.mxu0 %v1697
        %v2201 = vpop.f32.mrf.mxu0
        %v2202 = vadd.f32 %v2183, %v2201
        %v2203 = vpop.f32.mrf.mxu0
        %v2204 = vadd.f32 %v2185, %v2203
        %2205 = vdwg.mxu0
        %2206 = vmatpush.bf16.msra.mxu0 %v2011
        %2207 = vmatpush.bf16.msra.mxu0 %v2009
        %2208 = vmatpush.bf16.msra.mxu0 %v2007
        %2209 = vmatpush.bf16.msra.mxu0 %v2005
        %2210 = vmatpush.bf16.msra.mxu0 %v2003
        %2211 = vmatpush.bf16.msra.mxu0 %v2001
        %2212 = vmatpush.bf16.msra.mxu0 %v1999
        %2213 = vmatpush.bf16.msra.mxu0 %v1997
        %2214 = vmatmul.bf16.gmra.mxu0 %v1694
        %v2215 = vpop.f32.mrf.mxu0
        %v2216 = vadd.f32 %v2197, %v2215
        %v2217 = vpop.f32.mrf.mxu0
        %v2218 = vadd.f32 %v2199, %v2217
        %2219 = vmatmul.bf16.gmra.mxu0 %v1698
        %v2220 = vpop.f32.mrf.mxu0
        %v2221 = vadd.f32 %v2202, %v2220
        %v2222 = vpop.f32.mrf.mxu0
        %v2223 = vadd.f32 %v2204, %v2222
        %2224 = vdwg.mxu0
        %2225 = vmatpush.bf16.msra.mxu0 %v2027
        %2226 = vmatpush.bf16.msra.mxu0 %v2025
        %2227 = vmatpush.bf16.msra.mxu0 %v2023
        %2228 = vmatpush.bf16.msra.mxu0 %v2021
        %2229 = vmatpush.bf16.msra.mxu0 %v2019
        %2230 = vmatpush.bf16.msra.mxu0 %v2017
        %2231 = vmatpush.bf16.msra.mxu0 %v2015
        %2232 = vmatpush.bf16.msra.mxu0 %v2013
        %2233 = vmatmul.bf16.gmra.mxu0 %v1695
        %v2234 = vpop.f32.mrf.mxu0
        %v2235 = vadd.f32 %v2216, %v2234
        %v2236 = vpop.f32.mrf.mxu0
        %v2237 = vadd.f32 %v2218, %v2236
        %2238 = vmatmul.bf16.gmra.mxu0 %v1699
        %v2239 = vpop.f32.mrf.mxu0
        %v2240 = vadd.f32 %v2221, %v2239
        %v2241 = vpop.f32.mrf.mxu0
        %v2242 = vadd.f32 %v2223, %v2241
        %2243 = vdwg.mxu0
        %v2244 = vadd.f32 %v1700, %v2159
        %v2245 = vadd.f32 %v1701, %v2235
        %v2246 = vadd.f32 %v1702, %v2161
        %v2247 = vadd.f32 %v1703, %v2237
        %v2248 = vadd.f32 %v1704, %v2164
        %v2249 = vadd.f32 %v1705, %v2240
        %v2250 = vadd.f32 %v1706, %v2166
        %v2251 = vadd.f32 %v1707, %v2242
        %2252 = vst [vmem:[#allocation3] sm:$0xff] %v2244
        %2253 = vst [vmem:[#allocation3 + $0x8] sm:$0xff] %v2245
        %2254 = vst [vmem:[#allocation3 + $0x10] sm:$0xff] %v2246
        %2255 = vst [vmem:[#allocation3 + $0x18] sm:$0xff] %v2247
        %2256 = vst [vmem:[#allocation3 + $0x20] sm:$0xff] %v2248
        %2257 = vst [vmem:[#allocation3 + $0x28] sm:$0xff] %v2249
        %2258 = vst [vmem:[#allocation3 + $0x30] sm:$0xff] %v2250
        %2259 = vst [vmem:[#allocation3 + $0x38] sm:$0xff] %v2251
        %p2260 = scmp.eq.s32.totalorder %s40, 3
        // Predicated region
        $region81: #{tpu_custom_call.1} parent=47 // pred_check
          %p2261 = pneg %p2260
        $region82: #{tpu_custom_call.1} parent=47 // pred_check_branch
          %2263 = sbr.rel (%p2261) target = $region84
        $region83: #{tpu_custom_call.1} parent=47 // pred_region
          %v2264 = vld [vmem:[#allocation2] sm:$0xff]
          %v2265 = vld [vmem:[#allocation9] sm:$0xf]
          %v2267 = vperm.slane %v2265, 0
          %v2268 = vperm.slane %v2265, 1
          %v2269 = vperm.slane %v2265, 2
          %v2270 = vperm.slane %v2265, 3
          %v2271 = vrot.slane %v2268, 6
          %v2272 = vrot.slane %v2269, 4
          %v2273 = vrot.slane %v2270, 2
          %v2274 = vsel %vm642, %v2267, %v2271
          %v2275 = vsel %vm644, %v2272, %v2273
          %v2276 = vsel %vm646, %v2274, %v2275
          %v2278 = vadd.f32 %v2264, %v2276
          %v2279 = vmax.f32 %v2278, 0.0
          %2281 = vst [vmem:[#allocation1] ss:$4 sm:$0xff] %v2279
          %v2282 = vld.sshfl [vmem:[#allocation1] sm:$0xff pattern:$0x73625140]
          %v2283 = vld.sshfl [vmem:[#allocation1 + $0x8] sm:$0xff pattern:$0x73625140]
          %v2284 = vld.sshfl [vmem:[#allocation1 + $0x10] sm:$0xff pattern:$0x73625140]
          %v2285 = vld.sshfl [vmem:[#allocation1 + $0x18] sm:$0xff pattern:$0x73625140]
          %v2290 = vpack.c.bf16 %v2282, %v2282
          %v2291 = vpack.c.bf16 %v2283, %v2283
          %v2292 = vpack.c.bf16 %v2284, %v2284
          %v2293 = vpack.c.bf16 %v2285, %v2285
          %v2294 = vld [vmem:[#allocation10] sm:$0xf]
          %v2295 = vld [vmem:[#allocation10 + $0x4] sm:$0xf]
          %v2296 = vld [vmem:[#allocation10 + $0x8] sm:$0xf]
          %v2297 = vld [vmem:[#allocation10 + $0xc] sm:$0xf]
          %v2298 = vld [vmem:[#allocation10 + $0x10] sm:$0xf]
          %v2299 = vld [vmem:[#allocation10 + $0x14] sm:$0xf]
          %v2300 = vld [vmem:[#allocation10 + $0x18] sm:$0xf]
          %v2301 = vld [vmem:[#allocation10 + $0x1c] sm:$0xf]
          %v2302 = vld [vmem:[#allocation10 + $0x20] sm:$0xf]
          %v2303 = vld [vmem:[#allocation10 + $0x24] sm:$0xf]
          %v2304 = vld [vmem:[#allocation10 + $0x28] sm:$0xf]
          %v2305 = vld [vmem:[#allocation10 + $0x2c] sm:$0xf]
          %v2306 = vld [vmem:[#allocation10 + $0x30] sm:$0xf]
          %v2307 = vld [vmem:[#allocation10 + $0x34] sm:$0xf]
          %v2308 = vld [vmem:[#allocation10 + $0x38] sm:$0xf]
          %v2309 = vld [vmem:[#allocation10 + $0x3c] sm:$0xf]
          %v2310 = vld [vmem:[#allocation10 + $0x40] sm:$0xf]
          %v2311 = vld [vmem:[#allocation10 + $0x44] sm:$0xf]
          %v2312 = vld [vmem:[#allocation10 + $0x48] sm:$0xf]
          %v2313 = vld [vmem:[#allocation10 + $0x4c] sm:$0xf]
          %v2314 = vld [vmem:[#allocation10 + $0x50] sm:$0xf]
          %v2315 = vld [vmem:[#allocation10 + $0x54] sm:$0xf]
          %v2316 = vld [vmem:[#allocation10 + $0x58] sm:$0xf]
          %v2317 = vld [vmem:[#allocation10 + $0x5c] sm:$0xf]
          %v2318 = vld [vmem:[#allocation10 + $0x60] sm:$0xf]
          %v2319 = vld [vmem:[#allocation10 + $0x64] sm:$0xf]
          %v2320 = vld [vmem:[#allocation10 + $0x68] sm:$0xf]
          %v2321 = vld [vmem:[#allocation10 + $0x6c] sm:$0xf]
          %v2322 = vld [vmem:[#allocation10 + $0x70] sm:$0xf]
          %v2323 = vld [vmem:[#allocation10 + $0x74] sm:$0xf]
          %v2324 = vld [vmem:[#allocation10 + $0x78] sm:$0xf]
          %v2325 = vld [vmem:[#allocation10 + $0x7c] sm:$0xf]
          %v2326 = vld [vmem:[#allocation10 + $0x80] sm:$0xf]
          %v2327 = vld [vmem:[#allocation10 + $0x84] sm:$0xf]
          %v2328 = vld [vmem:[#allocation10 + $0x88] sm:$0xf]
          %v2329 = vld [vmem:[#allocation10 + $0x8c] sm:$0xf]
          %v2330 = vld [vmem:[#allocation10 + $0x90] sm:$0xf]
          %v2331 = vld [vmem:[#allocation10 + $0x94] sm:$0xf]
          %v2332 = vld [vmem:[#allocation10 + $0x98] sm:$0xf]
          %v2333 = vld [vmem:[#allocation10 + $0x9c] sm:$0xf]
          %v2334 = vld [vmem:[#allocation10 + $0xa0] sm:$0xf]
          %v2335 = vld [vmem:[#allocation10 + $0xa4] sm:$0xf]
          %v2336 = vld [vmem:[#allocation10 + $0xa8] sm:$0xf]
          %v2337 = vld [vmem:[#allocation10 + $0xac] sm:$0xf]
          %v2338 = vld [vmem:[#allocation10 + $0xb0] sm:$0xf]
          %v2339 = vld [vmem:[#allocation10 + $0xb4] sm:$0xf]
          %v2340 = vld [vmem:[#allocation10 + $0xb8] sm:$0xf]
          %v2341 = vld [vmem:[#allocation10 + $0xbc] sm:$0xf]
          %v2342 = vld [vmem:[#allocation10 + $0xc0] sm:$0xf]
          %v2343 = vld [vmem:[#allocation10 + $0xc4] sm:$0xf]
          %v2344 = vld [vmem:[#allocation10 + $0xc8] sm:$0xf]
          %v2345 = vld [vmem:[#allocation10 + $0xcc] sm:$0xf]
          %v2346 = vld [vmem:[#allocation10 + $0xd0] sm:$0xf]
          %v2347 = vld [vmem:[#allocation10 + $0xd4] sm:$0xf]
          %v2348 = vld [vmem:[#allocation10 + $0xd8] sm:$0xf]
          %v2349 = vld [vmem:[#allocation10 + $0xdc] sm:$0xf]
          %v2350 = vld [vmem:[#allocation10 + $0xe0] sm:$0xf]
          %v2351 = vld [vmem:[#allocation10 + $0xe4] sm:$0xf]
          %v2352 = vld [vmem:[#allocation10 + $0xe8] sm:$0xf]
          %v2353 = vld [vmem:[#allocation10 + $0xec] sm:$0xf]
          %v2354 = vld [vmem:[#allocation10 + $0xf0] sm:$0xf]
          %v2355 = vld [vmem:[#allocation10 + $0xf4] sm:$0xf]
          %v2356 = vld [vmem:[#allocation10 + $0xf8] sm:$0xf]
          %v2357 = vld [vmem:[#allocation10 + $0xfc] sm:$0xf]
          %v2358 = vld [vmem:[#allocation12] sm:$0x1]
          %v2360 = vperm.slane %v2358, 0
          %v2426 = vunpack.c.l.b16 %v2294
          %v2427 = vunpack.c.l.b16 %v2295
          %v2428 = vunpack.c.l.b16 %v2296
          %v2429 = vunpack.c.l.b16 %v2297
          %v2430 = vunpack.c.l.b16 %v2298
          %v2431 = vunpack.c.l.b16 %v2299
          %v2432 = vunpack.c.l.b16 %v2300
          %v2433 = vunpack.c.l.b16 %v2301
          %v2434 = vunpack.c.l.b16 %v2302
          %v2435 = vunpack.c.l.b16 %v2303
          %v2436 = vunpack.c.l.b16 %v2304
          %v2437 = vunpack.c.l.b16 %v2305
          %v2438 = vunpack.c.l.b16 %v2306
          %v2439 = vunpack.c.l.b16 %v2307
          %v2440 = vunpack.c.l.b16 %v2308
          %v2441 = vunpack.c.l.b16 %v2309
          %v2442 = vunpack.c.l.b16 %v2310
          %v2443 = vunpack.c.l.b16 %v2311
          %v2444 = vunpack.c.l.b16 %v2312
          %v2445 = vunpack.c.l.b16 %v2313
          %v2446 = vunpack.c.l.b16 %v2314
          %v2447 = vunpack.c.l.b16 %v2315
          %v2448 = vunpack.c.l.b16 %v2316
          %v2449 = vunpack.c.l.b16 %v2317
          %v2450 = vunpack.c.l.b16 %v2318
          %v2451 = vunpack.c.l.b16 %v2319
          %v2452 = vunpack.c.l.b16 %v2320
          %v2453 = vunpack.c.l.b16 %v2321
          %v2454 = vunpack.c.l.b16 %v2322
          %v2455 = vunpack.c.l.b16 %v2323
          %v2456 = vunpack.c.l.b16 %v2324
          %v2457 = vunpack.c.l.b16 %v2325
          %v2458 = vunpack.c.l.b16 %v2326
          %v2459 = vunpack.c.l.b16 %v2327
          %v2460 = vunpack.c.l.b16 %v2328
          %v2461 = vunpack.c.l.b16 %v2329
          %v2462 = vunpack.c.l.b16 %v2330
          %v2463 = vunpack.c.l.b16 %v2331
          %v2464 = vunpack.c.l.b16 %v2332
          %v2465 = vunpack.c.l.b16 %v2333
          %v2466 = vunpack.c.l.b16 %v2334
          %v2467 = vunpack.c.l.b16 %v2335
          %v2468 = vunpack.c.l.b16 %v2336
          %v2469 = vunpack.c.l.b16 %v2337
          %v2470 = vunpack.c.l.b16 %v2338
          %v2471 = vunpack.c.l.b16 %v2339
          %v2472 = vunpack.c.l.b16 %v2340
          %v2473 = vunpack.c.l.b16 %v2341
          %v2474 = vunpack.c.l.b16 %v2342
          %v2475 = vunpack.c.l.b16 %v2343
          %v2476 = vunpack.c.l.b16 %v2344
          %v2477 = vunpack.c.l.b16 %v2345
          %v2478 = vunpack.c.l.b16 %v2346
          %v2479 = vunpack.c.l.b16 %v2347
          %v2480 = vunpack.c.l.b16 %v2348
          %v2481 = vunpack.c.l.b16 %v2349
          %v2482 = vunpack.c.l.b16 %v2350
          %v2483 = vunpack.c.l.b16 %v2351
          %v2484 = vunpack.c.l.b16 %v2352
          %v2485 = vunpack.c.l.b16 %v2353
          %v2486 = vunpack.c.l.b16 %v2354
          %v2487 = vunpack.c.l.b16 %v2355
          %v2488 = vunpack.c.l.b16 %v2356
          %v2489 = vunpack.c.l.b16 %v2357
          %v2490 = vpack.c.b16 %v2427, %v2426
          %v2491 = vpack.c.b16 %v2429, %v2428
          %v2492 = vpack.c.b16 %v2431, %v2430
          %v2493 = vpack.c.b16 %v2433, %v2432
          %v2494 = vpack.c.b16 %v2435, %v2434
          %v2495 = vpack.c.b16 %v2437, %v2436
          %v2496 = vpack.c.b16 %v2439, %v2438
          %v2497 = vpack.c.b16 %v2441, %v2440
          %v2498 = vpack.c.b16 %v2443, %v2442
          %v2499 = vpack.c.b16 %v2445, %v2444
          %v2500 = vpack.c.b16 %v2447, %v2446
          %v2501 = vpack.c.b16 %v2449, %v2448
          %v2502 = vpack.c.b16 %v2451, %v2450
          %v2503 = vpack.c.b16 %v2453, %v2452
          %v2504 = vpack.c.b16 %v2455, %v2454
          %v2505 = vpack.c.b16 %v2457, %v2456
          %v2506 = vpack.c.b16 %v2459, %v2458
          %v2507 = vpack.c.b16 %v2461, %v2460
          %v2508 = vpack.c.b16 %v2463, %v2462
          %v2509 = vpack.c.b16 %v2465, %v2464
          %v2510 = vpack.c.b16 %v2467, %v2466
          %v2511 = vpack.c.b16 %v2469, %v2468
          %v2512 = vpack.c.b16 %v2471, %v2470
          %v2513 = vpack.c.b16 %v2473, %v2472
          %v2514 = vpack.c.b16 %v2475, %v2474
          %v2515 = vpack.c.b16 %v2477, %v2476
          %v2516 = vpack.c.b16 %v2479, %v2478
          %v2517 = vpack.c.b16 %v2481, %v2480
          %v2518 = vpack.c.b16 %v2483, %v2482
          %v2519 = vpack.c.b16 %v2485, %v2484
          %v2520 = vpack.c.b16 %v2487, %v2486
          %v2521 = vpack.c.b16 %v2489, %v2488
          %2554 = vmatpush.bf16.msra.mxu0 %v2497
          %2555 = vmatpush.bf16.msra.mxu0 %v2496
          %2556 = vmatpush.bf16.msra.mxu0 %v2495
          %2557 = vmatpush.bf16.msra.mxu0 %v2494
          %2558 = vmatpush.bf16.msra.mxu0 %v2493
          %2559 = vmatpush.bf16.msra.mxu0 %v2492
          %2560 = vmatpush.bf16.msra.mxu0 %v2491
          %2561 = vmatpush.bf16.msra.mxu0 %v2490
          %2562 = vmatmul.bf16.gmra.mxu0 %v2290
          %v2563 = vpop.f32.mrf.mxu0
          %v2564 = vadd.f32 %v2360, %v2563
          %v2565 = vpop.f32.mrf.mxu0
          %2566 = vdwg.mxu0
          %2567 = vmatpush.bf16.msra.mxu0 %v2505
          %2568 = vmatpush.bf16.msra.mxu0 %v2504
          %2569 = vmatpush.bf16.msra.mxu0 %v2503
          %2570 = vmatpush.bf16.msra.mxu0 %v2502
          %2571 = vmatpush.bf16.msra.mxu0 %v2501
          %2572 = vmatpush.bf16.msra.mxu0 %v2500
          %2573 = vmatpush.bf16.msra.mxu0 %v2499
          %2574 = vmatpush.bf16.msra.mxu0 %v2498
          %2575 = vmatmul.bf16.gmra.mxu0 %v2291
          %v2576 = vpop.f32.mrf.mxu0
          %v2577 = vadd.f32 %v2564, %v2576
          %v2578 = vpop.f32.mrf.mxu0
          %2579 = vdwg.mxu0
          %2580 = vmatpush.bf16.msra.mxu0 %v2513
          %2581 = vmatpush.bf16.msra.mxu0 %v2512
          %2582 = vmatpush.bf16.msra.mxu0 %v2511
          %2583 = vmatpush.bf16.msra.mxu0 %v2510
          %2584 = vmatpush.bf16.msra.mxu0 %v2509
          %2585 = vmatpush.bf16.msra.mxu0 %v2508
          %2586 = vmatpush.bf16.msra.mxu0 %v2507
          %2587 = vmatpush.bf16.msra.mxu0 %v2506
          %2588 = vmatmul.bf16.gmra.mxu0 %v2292
          %v2589 = vpop.f32.mrf.mxu0
          %v2590 = vadd.f32 %v2577, %v2589
          %v2591 = vpop.f32.mrf.mxu0
          %2592 = vdwg.mxu0
          %2593 = vmatpush.bf16.msra.mxu0 %v2521
          %2594 = vmatpush.bf16.msra.mxu0 %v2520
          %2595 = vmatpush.bf16.msra.mxu0 %v2519
          %2596 = vmatpush.bf16.msra.mxu0 %v2518
          %2597 = vmatpush.bf16.msra.mxu0 %v2517
          %2598 = vmatpush.bf16.msra.mxu0 %v2516
          %2599 = vmatpush.bf16.msra.mxu0 %v2515
          %2600 = vmatpush.bf16.msra.mxu0 %v2514
          %2601 = vmatmul.bf16.gmra.mxu0 %v2293
          %v2602 = vpop.f32.mrf.mxu0
          %v2603 = vadd.f32 %v2590, %v2602
          %v2604 = vpop.f32.mrf.mxu0
          %2605 = vdwg.mxu0
          %2606 = vst [vmem:[#allocation17] sm:$0x3] %v2603
          %v2607 = vld [vmem:[#allocation3] sm:$0xff]
          %v2608 = vld [vmem:[#allocation3 + $0x8] sm:$0xff]
          %v2609 = vld [vmem:[#allocation3 + $0x10] sm:$0xff]
          %v2610 = vld [vmem:[#allocation3 + $0x18] sm:$0xff]
          %v2611 = vld [vmem:[#allocation3 + $0x20] sm:$0xff]
          %v2612 = vld [vmem:[#allocation3 + $0x28] sm:$0xff]
          %v2613 = vld [vmem:[#allocation3 + $0x30] sm:$0xff]
          %v2614 = vld [vmem:[#allocation3 + $0x38] sm:$0xff]
          %v2615 = vld [vmem:[#allocation15] sm:$0x3]
          %v2617 = vperm.slane %v2615, 0
          %v2618 = vperm.slane %v2615, 1
          %v2621 = vadd.f32 %v2607, %v2617
          %v2622 = vadd.f32 %v2608, %v2618
          %v2623 = vadd.f32 %v2609, %v2617
          %v2624 = vadd.f32 %v2610, %v2618
          %v2625 = vadd.f32 %v2611, %v2617
          %v2626 = vadd.f32 %v2612, %v2618
          %v2627 = vadd.f32 %v2613, %v2617
          %v2628 = vadd.f32 %v2614, %v2618
          %v2629 = vmax.f32 %v2621, 0.0
          %v2630 = vmax.f32 %v2622, 0.0
          %v2631 = vmax.f32 %v2623, 0.0
          %v2632 = vmax.f32 %v2624, 0.0
          %v2633 = vmax.f32 %v2625, 0.0
          %v2634 = vmax.f32 %v2626, 0.0
          %v2635 = vmax.f32 %v2627, 0.0
          %v2636 = vmax.f32 %v2628, 0.0
          %v2637 = vadd.f32 %v2629, %v2631
          %v2638 = vrot.slane %v2637, 4
          %v2639 = vadd.f32 %v2637, %v2638
          %v2640 = vrot.slane %v2639, 2
          %v2641 = vadd.f32 %v2639, %v2640
          %v2642 = vrot.slane %v2641, 1
          %v2643 = vadd.f32 %v2641, %v2642
          %v2644 = vadd.f32 %v2630, %v2632
          %v2645 = vrot.slane %v2644, 4
          %v2646 = vadd.f32 %v2644, %v2645
          %v2647 = vrot.slane %v2646, 2
          %v2648 = vadd.f32 %v2646, %v2647
          %v2649 = vrot.slane %v2648, 1
          %v2650 = vadd.f32 %v2648, %v2649
          %v2651 = vadd.f32 %v2633, %v2635
          %v2652 = vrot.slane %v2651, 4
          %v2653 = vadd.f32 %v2651, %v2652
          %v2654 = vrot.slane %v2653, 2
          %v2655 = vadd.f32 %v2653, %v2654
          %v2656 = vrot.slane %v2655, 1
          %v2657 = vadd.f32 %v2655, %v2656
          %v2658 = vadd.f32 %v2634, %v2636
          %v2659 = vrot.slane %v2658, 4
          %v2660 = vadd.f32 %v2658, %v2659
          %v2661 = vrot.slane %v2660, 2
          %v2662 = vadd.f32 %v2660, %v2661
          %v2663 = vrot.slane %v2662, 1
          %v2664 = vadd.f32 %v2662, %v2663
          %v2665 = vmul.f32 %v2643, %v619
          %v2666 = vmul.f32 %v2650, %v619
          %v2667 = vmul.f32 %v2657, %v619
          %v2668 = vmul.f32 %v2664, %v619
          %v2673 = vrot.slane %v2666, 6
          %v2674 = vrot.slane %v2668, 6
          %v2675 = vsel %vm642, %v2665, %v2673
          %v2676 = vsel %vm642, %v2667, %v2674
          %v2677 = vsel %vm651, %v2675, %v2675
          %v2678 = vsel %vm653, %v2675, %v2677
          %v2679 = vrot.slane %v2676, 7
          %v2680 = vsel %vm656, %v2679, %v2678
          %v2681 = vsel %vm658, %v2679, %v2680
          %v2682 = vsel %vm660, %v2679, %v2681
          %v2683 = vsel %vm662, %v2679, %v2682
          %2685 = vst [vmem:[#allocation19] sm:$0xf] %v2683
        $region84: #{tpu_custom_call.1} parent=47 // pred_fallthru
          _
        %s2686 = sand.u32 %s221, 1
        %s2687 = scalar_lea.sflag [#allocation6], %s2686
        %s2688 = sand.u32 %s221, 1
        %s2689 = smul.addr %s2688, 8
        %s2690 = scalar_lea.vmem [#allocation16], %s2689
        // Predicated region
        $region85: #{tpu_custom_call.1} parent=47 // pred_check
          %p2691 = pneg %p231
        $region86: #{tpu_custom_call.1} parent=47 // pred_check_branch
          %2693 = sbr.rel (%p2691) target = $region88
        $region87: #{tpu_custom_call.1} parent=47 // pred_region
          %s2694 = smul.u32 4, %s40
          %2696 = vsyncadd %s2687, 0
          %s2697 = smul.addr %s39, 16
          %s2698 = sadd.s32 %s2694, %s2697
          %s2699 = smul.addr %s2698, 2
          %s2700 = scalar_lea.hbm %s7, %s2699
          %s2702 = sshll.u32 %s2690, 4
          %s2703 = int_to_ptr.vmem [resolvable:$true] %s2702
          %s2704 = sshll.u32 %s2700, 4
          %s2705 = int_to_ptr.hbm [resolvable:$true] %s2704
          %2707 = dma.vmem_to_hbm [thread:$0]  %s2703, 128, %s2705, %s2687
        $region88: #{tpu_custom_call.1} parent=47 // pred_fallthru
          _
        // Predicated region
        $region89: #{tpu_custom_call.1} parent=47 // pred_check
          %p2708 = pneg %p257
        $region90: #{tpu_custom_call.1} parent=47 // pred_check_branch
          %2710 = sbr.rel (%p2708) target = $region92
        $region91: #{tpu_custom_call.1} parent=47 // pred_region
          %2712 = vsyncadd [#allocation18], 0
          %s2713 = smul.addr %s39, 2
          %s2714 = scalar_lea.hbm %s8, %s2713
          %s2716 = sshll.u32 [#allocation17], 4
          %s2717 = int_to_ptr.vmem [resolvable:$true] %s2716
          %s2718 = sshll.u32 %s2714, 4
          %s2719 = int_to_ptr.hbm [resolvable:$true] %s2718
          %2721 = dma.vmem_to_hbm [thread:$0]  %s2717, 32, %s2719, [#allocation18]
        $region92: #{tpu_custom_call.1} parent=47 // pred_fallthru
          _
        // Predicated region
        $region93: #{tpu_custom_call.1} parent=47 // pred_check
          %p2722 = pneg %p283
        $region94: #{tpu_custom_call.1} parent=47 // pred_check_branch
          %2724 = sbr.rel (%p2722) target = $region96
        $region95: #{tpu_custom_call.1} parent=47 // pred_region
          %2726 = vsyncadd [#allocation18], 0
          %s2727 = smul.addr %s39, 2
          %s2728 = smul.addr %s2727, 2
          %s2729 = scalar_lea.hbm %s9, %s2728
          %s2731 = sshll.u32 [#allocation19], 4
          %s2732 = int_to_ptr.vmem [resolvable:$true] %s2731
          %s2733 = sshll.u32 %s2729, 4
          %s2734 = int_to_ptr.hbm [resolvable:$true] %s2733
          %2736 = dma.vmem_to_hbm [thread:$0]  %s2732, 64, %s2734, [#allocation18]
        $region96: #{tpu_custom_call.1} parent=47 // pred_fallthru
          _
        // Predicated region
        $region97: #{tpu_custom_call.1} parent=47 // pred_check
          %p2737 = pneg %p257
        $region98: #{tpu_custom_call.1} parent=47 // pred_check_branch
          %2739 = sbr.rel (%p2737) target = $region100
        $region99: #{tpu_custom_call.1} parent=47 // pred_region
          %2741 = dma.done [#allocation18], 32
        $region100: #{tpu_custom_call.1} parent=47 // pred_fallthru
          _
        // Predicated region
        $region101: #{tpu_custom_call.1} parent=47 // pred_check
          %p2742 = pneg %p283
        $region102: #{tpu_custom_call.1} parent=47 // pred_check_branch
          %2744 = sbr.rel (%p2742) target = $region104
        $region103: #{tpu_custom_call.1} parent=47 // pred_region
          %2746 = dma.done [#allocation18], 64
        $region104: #{tpu_custom_call.1} parent=47 // pred_fallthru
          _
      $region48: #{tpu_custom_call.1} parent=5 // pred_fallthru
        _
      %p2747 = scmp.le.s32.totalorder 2, %s30
      // Predicated region
      $region105: #{tpu_custom_call.1} parent=5 // pred_check
        %p2748 = pneg %p2747
      $region106: #{tpu_custom_call.1} parent=5 // pred_check_branch
        %2750 = sbr.rel (%p2748) target = $region108
      $region107: #{tpu_custom_call.1} parent=5 // pred_region
        %s2751 = ssub.s32 %s30, 2
        // Predicated region
        $region109: #{tpu_custom_call.1} parent=107 // pred_check
          %p2752 = pneg %p237
        $region110: #{tpu_custom_call.1} parent=107 // pred_check_branch
          %2754 = sbr.rel (%p2752) target = $region112
        $region111: #{tpu_custom_call.1} parent=107 // pred_region
          %s2755 = sand.u32 %s222, 1
          %s2756 = scalar_lea.sflag [#allocation6], %s2755
          %s2757 = sand.u32 %s222, 1
          %s2758 = smul.addr %s2757, 8
          %s2759 = scalar_lea.vmem [#allocation16], %s2758
          %2761 = dma.done %s2756, 128
        $region112: #{tpu_custom_call.1} parent=107 // pred_fallthru
          _
      $region108: #{tpu_custom_call.1} parent=5 // pred_fallthru
        _
    $region6: #{tpu_custom_call.1} parent=1 // loop_footer
      %s34 = sadd.s32 1, %s30
    $region7: #{tpu_custom_call.1} parent=1 // loop_footer_branch
      %29 = sbr.rel target = $region3
    $region8: #{tpu_custom_call.1} parent=1 // loop_exit
      _
    %2762 = vsyncpa [#allocation5], 1
    %s2763 = scalar_lea.sflag [#allocation5], 1
    %2764 = vsyncpa %s2763, 1
    %2765 = vsyncpa [#allocation8], 1
    %s2766 = scalar_lea.sflag [#allocation8], 1
    %2767 = vsyncpa %s2766, 1
    %2768 = vsyncpa [#allocation11], 1
    %2769 = vsyncpa [#allocation14], 1
    %s2770 = scalar_lea.sflag [#allocation14], 1
    %2771 = vsyncpa %s2770, 1
    %2772 = vsyncpa [#allocation6], 1
    %s2773 = scalar_lea.sflag [#allocation6], 1
    %2774 = vsyncpa %s2773, 1
    %2775 = vsyncpa [#allocation18], 1

</llo_original>
